<compile_context>
chip_gen: v6e
topology: v6e:2x2x1
jax: 0.10.0
libtpu: 0.0.40
codegen_flags: <defaults>
</compile_context>

<pallas_src>
import functools
import math

import jax
import jax.numpy as jnp
from jax.experimental import pallas as pl
from jax.experimental.pallas import tpu as pltpu

TWO_PI = 6.283185  # truncated literal, exactly as in the PyTorch module


def _elu(z):
    # torch.nn.ELU(alpha=1.0).  exp-1 (rather than expm1) is kept because it
    # is guaranteed to lower on all Mosaic versions; the accuracy delta is far
    # below fp32 model tolerance.
    return jnp.where(z > 0, z, jnp.exp(z) - 1.0)


def _pca_kernel(x_ref, g0_ref, g1_ref,
                w1r_ref, w1c_ref, w1s_ref, b1_ref,
                w2_ref, b2_ref, w3_ref, b3_ref, w4_ref, b4_ref,
                w5_ref, b5_ref, o_ref, *, n_rest):
    # Batch-on-lanes layout: x block is (D, TB); activations are (16, TB).
    x_rest = x_ref[:n_rest, :]                   # (D-2, TB)
    x0 = x_ref[n_rest:n_rest + 1, :]             # (1, TB)  last-but-one column of x
    x1 = x_ref[n_rest + 1:n_rest + 2, :]         # (1, TB)  last column of x

    # Fourier projection (K=2 contraction) as two VPU broadcast-FMAs.
    # 2*pi is already folded into g0/g1 by the wrapper.
    proj = g0_ref[...] * x0 + g1_ref[...] * x1   # (F,1)*(1,TB) -> (F, TB)
    cosf = jnp.cos(proj)
    sinf = jnp.sin(proj)

    # Layer 1 with W1^T split along its input dim so we never concatenate
    # [x_rest; cos; sin] along a non-tile-aligned sublane axis:
    #   W1^T @ [x_rest; cos; sin] == W1r^T@x_rest + W1c^T@cos + W1s^T@sin
    h = (jnp.dot(w1r_ref[...], x_rest, preferred_element_type=jnp.float32)
         + jnp.dot(w1c_ref[...], cosf, preferred_element_type=jnp.float32)
         + jnp.dot(w1s_ref[...], sinf, preferred_element_type=jnp.float32)
         + b1_ref[...])
    h = _elu(h)
    h = _elu(jnp.dot(w2_ref[...], h, preferred_element_type=jnp.float32) + b2_ref[...])
    h = _elu(jnp.dot(w3_ref[...], h, preferred_element_type=jnp.float32) + b3_ref[...])
    h = _elu(jnp.dot(w4_ref[...], h, preferred_element_type=jnp.float32) + b4_ref[...])

    # Final (16 -> 1) layer as VPU multiply + sublane (XLU) reduction; an
    # M=1 MXU matmul would waste a whole push for 16 MACs per lane.
    o_ref[...] = (jnp.sum(w5_ref[...] * h, axis=0, keepdims=True)  # (1, TB)
                  + b5_ref[...])


def pca_forward(x, gaussian_matrix, params, *, tile_b=2048):
    """x: (B, D) float32, gaussian_matrix: (2, F) float32 -> (B, 1) float32.

    tile_b ~ 1024-2048 is comfortable on v7x (64 MiB VMEM / 2 TCs);
    2048-4096 works on v5e/v6e.  Must be a multiple of 128 when < B.
    """
    B, D = x.shape
    F = gaussian_matrix.shape[1]
    n_rest = D - 2

    # ---- layout plumbing (wrapper-side, once): batch on the lane axis ----
    xt = x.T                                     # (D, B)
    g_scaled = TWO_PI * gaussian_matrix          # fold the 2*pi constant once
    g0 = g_scaled[0].reshape(F, 1)               # (F, 1)
    g1 = g_scaled[1].reshape(F, 1)               # (F, 1)

    w1, b1, w2, b2, w3, b3, w4, b4, w5, b5 = params
    w1t = w1.T                                   # (16, IN)
    w1r = w1t[:, :n_rest]                        # (16, D-2)
    w1c = w1t[:, n_rest:n_rest + F]              # (16, F)
    w1s = w1t[:, n_rest + F:]                    # (16, F)
    b1t, b2t, b3t, b4t, b5t = (b.reshape(-1, 1) for b in (b1, b2, b3, b4, b5))

    # ---- batch tiling ----
    if tile_b >= B:
        tile_b = B                               # block == full array is legal
    else:
        tile_b = max(128, (tile_b // 128) * 128) # lane dim multiple of 128
    grid = (pl.cdiv(B, tile_b),)

    def const_spec(shape):
        return pl.BlockSpec(shape, lambda i: (0, 0))   # VMEM-resident across steps

    inputs = (xt, g0, g1,
              w1r, w1c, w1s, b1t,
              w2.T, b2t, w3.T, b3t, w4.T, b4t, w5, b5t)
    in_specs = ([pl.BlockSpec((D, tile_b), lambda i: (0, i))]
                + [const_spec(a.shape) for a in inputs[1:]])

    flops = 2 * B * (16 * (n_rest + 2 * F) + 3 * 16 * 16 + 16 + 2 * F)
    transcendentals = B * (2 * F + 4 * 16)            # cos, sin, 4x ELU exp
    bytes_accessed = 4 * (B * (D + 1) + sum(int(a.size) for a in inputs[1:]))

    out_t = pl.pallas_call(
        functools.partial(_pca_kernel, n_rest=n_rest),
        out_shape=jax.ShapeDtypeStruct((1, B), jnp.float32),
        grid=grid,
        in_specs=in_specs,
        out_specs=pl.BlockSpec((1, tile_b), lambda i: (0, i)),
        compiler_params=pltpu.CompilerParams(
            dimension_semantics=("parallel",)),
        cost_estimate=pl.CostEstimate(
            flops=flops, transcendentals=transcendentals,
            bytes_accessed=bytes_accessed),
    )(*inputs)
    return out_t.T                               # (B, 1), matches the module


def init_params(key, input_size):
    """Deterministic init matching nn.Linear's default uniform bounds."""
    layer_sizes = [(input_size, 16), (16, 16), (16, 16), (16, 16), (16, 1)]
    params = []
    for fan_in, fan_out in layer_sizes:
        key, kw, kb = jax.random.split(key, 3)
        bound = 1.0 / math.sqrt(fan_in)
        w = jax.random.uniform(kw, (fan_in, fan_out), jnp.float32, -bound, bound)
        b = jax.random.uniform(kb, (1, fan_out), jnp.float32, -bound, bound)
        params += [w, b]
    return params


def reference_forward(x, gaussian_matrix, params):
    """Pure-JAX replica of the PyTorch forward for verification."""
    x_light = TWO_PI * (x[:, -2:] @ gaussian_matrix)
    x_light = jnp.concatenate([jnp.cos(x_light), jnp.sin(x_light)], axis=-1)
    h = jnp.concatenate([x[:, :-2], x_light], axis=-1)
    w1, b1, w2, b2, w3, b3, w4, b4, w5, b5 = params
    h = _elu(h @ w1 + b1)
    h = _elu(h @ w2 + b2)
    h = _elu(h @ w3 + b3)
    h = _elu(h @ w4 + b4)
    return h @ w5 + b5


if __name__ == "__main__":
    # Small shapes consistent with the module:
    #   x: (B, D) with the last 2 columns being the "light" coords,
    #   gaussian_matrix: (2, F)  =>  PCA_INPUT_SIZE = (D - 2) + 2*F = 16
    B, D, F = 256, 10, 4
    pca_input_size = (D - 2) + 2 * F  # 16

    key = jax.random.PRNGKey(0)
    k_x, k_g, k_p = jax.random.split(key, 3)
    x = jax.random.normal(k_x, (B, D), dtype=jnp.float32)
    gaussian_matrix = jax.random.normal(k_g, (2, F), dtype=jnp.float32)
    params = init_params(k_p, pca_input_size)

    # tile_b=128 so the demo exercises a multi-step (pipelined) batch grid.
    out = pca_forward(x, gaussian_matrix, params, tile_b=128)
    out = jax.block_until_ready(out)

    ref = reference_forward(x, gaussian_matrix, params)
    assert out.shape == (B, 1)
    assert jnp.allclose(out, ref, atol=1e-4, rtol=1e-4), (out, ref)

    print("KERNEL_OK")
</pallas_src>

<mosaic_0001>
module attributes {stable_mosaic.version = 11 : i64} {
  func.func @_pca_kernel(%arg0: i32, %arg1: memref<10x128xf32, #tpu.memory_space<vmem>>, %arg2: memref<4x1xf32, #tpu.memory_space<vmem>>, %arg3: memref<4x1xf32, #tpu.memory_space<vmem>>, %arg4: memref<16x8xf32, #tpu.memory_space<vmem>>, %arg5: memref<16x4xf32, #tpu.memory_space<vmem>>, %arg6: memref<16x4xf32, #tpu.memory_space<vmem>>, %arg7: memref<16x1xf32, #tpu.memory_space<vmem>>, %arg8: memref<16x16xf32, #tpu.memory_space<vmem>>, %arg9: memref<16x1xf32, #tpu.memory_space<vmem>>, %arg10: memref<16x16xf32, #tpu.memory_space<vmem>>, %arg11: memref<16x1xf32, #tpu.memory_space<vmem>>, %arg12: memref<16x16xf32, #tpu.memory_space<vmem>>, %arg13: memref<16x1xf32, #tpu.memory_space<vmem>>, %arg14: memref<16x1xf32, #tpu.memory_space<vmem>>, %arg15: memref<1x1xf32, #tpu.memory_space<vmem>>, %arg16: memref<1x128xf32, #tpu.memory_space<vmem>>) attributes {dimension_semantics = [#tpu.dimension_semantics<parallel>], iteration_bounds = array<i64: 2>, scalar_prefetch = 0 : i64, scratch_operands = 0 : i64, tpu.core_type = #tpu.core_type<tc>, window_params = [{transform_indices = @transform_0, window_bounds = array<i64: 10, 128>}, {pipeline_mode = #tpu.pipeline_mode<synchronous>, transform_indices = @transform_1, window_bounds = array<i64: 4, 1>}, {pipeline_mode = #tpu.pipeline_mode<synchronous>, transform_indices = @transform_2, window_bounds = array<i64: 4, 1>}, {pipeline_mode = #tpu.pipeline_mode<synchronous>, transform_indices = @transform_3, window_bounds = array<i64: 16, 8>}, {pipeline_mode = #tpu.pipeline_mode<synchronous>, transform_indices = @transform_4, window_bounds = array<i64: 16, 4>}, {pipeline_mode = #tpu.pipeline_mode<synchronous>, transform_indices = @transform_5, window_bounds = array<i64: 16, 4>}, {pipeline_mode = #tpu.pipeline_mode<synchronous>, transform_indices = @transform_6, window_bounds = array<i64: 16, 1>}, {pipeline_mode = #tpu.pipeline_mode<synchronous>, transform_indices = @transform_7, window_bounds = array<i64: 16, 16>}, {pipeline_mode = #tpu.pipeline_mode<synchronous>, transform_indices = @transform_8, window_bounds = array<i64: 16, 1>}, {pipeline_mode = #tpu.pipeline_mode<synchronous>, transform_indices = @transform_9, window_bounds = array<i64: 16, 16>}, {pipeline_mode = #tpu.pipeline_mode<synchronous>, transform_indices = @transform_10, window_bounds = array<i64: 16, 1>}, {pipeline_mode = #tpu.pipeline_mode<synchronous>, transform_indices = @transform_11, window_bounds = array<i64: 16, 16>}, {pipeline_mode = #tpu.pipeline_mode<synchronous>, transform_indices = @transform_12, window_bounds = array<i64: 16, 1>}, {pipeline_mode = #tpu.pipeline_mode<synchronous>, transform_indices = @transform_13, window_bounds = array<i64: 16, 1>}, {pipeline_mode = #tpu.pipeline_mode<synchronous>, transform_indices = @transform_14, window_bounds = array<i64: 1, 1>}, {transform_indices = @transform_15, window_bounds = array<i64: 1, 128>}]} {
    %c0 = arith.constant 0 : index
    %c0_0 = arith.constant 0 : index
    %0 = vector.load %arg1[%c0, %c0_0] : memref<10x128xf32, #tpu.memory_space<vmem>>, vector<8x128xf32>
    %c8 = arith.constant 8 : index
    %c0_1 = arith.constant 0 : index
    %1 = vector.load %arg1[%c8, %c0_1] : memref<10x128xf32, #tpu.memory_space<vmem>>, vector<1x128xf32>
    %c9 = arith.constant 9 : index
    %c0_2 = arith.constant 0 : index
    %2 = vector.load %arg1[%c9, %c0_2] : memref<10x128xf32, #tpu.memory_space<vmem>>, vector<1x128xf32>
    %c0_3 = arith.constant 0 : index
    %c0_4 = arith.constant 0 : index
    %3 = vector.load %arg2[%c0_3, %c0_4] : memref<4x1xf32, #tpu.memory_space<vmem>>, vector<4x1xf32>
    %4 = vector.broadcast %3 : vector<4x1xf32> to vector<4x128xf32>
    %5 = vector.broadcast %1 : vector<1x128xf32> to vector<4x128xf32>
    %6 = arith.mulf %4, %5 : vector<4x128xf32>
    %c0_5 = arith.constant 0 : index
    %c0_6 = arith.constant 0 : index
    %7 = vector.load %arg3[%c0_5, %c0_6] : memref<4x1xf32, #tpu.memory_space<vmem>>, vector<4x1xf32>
    %8 = vector.broadcast %7 : vector<4x1xf32> to vector<4x128xf32>
    %9 = vector.broadcast %2 : vector<1x128xf32> to vector<4x128xf32>
    %10 = arith.mulf %8, %9 : vector<4x128xf32>
    %11 = arith.addf %6, %10 : vector<4x128xf32>
    %12 = math.cos %11 : vector<4x128xf32>
    %13 = math.sin %11 : vector<4x128xf32>
    %c0_7 = arith.constant 0 : index
    %c0_8 = arith.constant 0 : index
    %14 = vector.load %arg4[%c0_7, %c0_8] : memref<16x8xf32, #tpu.memory_space<vmem>>, vector<16x8xf32>
    %cst = arith.constant dense<0.000000e+00> : vector<16x128xf32>
    %15 = tpu.matmul %14, %0, %cst {dimension_numbers = #tpu.dot_dimension_numbers<[1], [0], [0], [1], [0, 0, 1, 1], [], []>} : vector<16x8xf32>, vector<8x128xf32>, vector<16x128xf32> -> vector<16x128xf32>
    %c0_9 = arith.constant 0 : index
    %c0_10 = arith.constant 0 : index
    %16 = vector.load %arg5[%c0_9, %c0_10] : memref<16x4xf32, #tpu.memory_space<vmem>>, vector<16x4xf32>
    %cst_11 = arith.constant dense<0.000000e+00> : vector<16x128xf32>
    %17 = tpu.matmul %16, %12, %cst_11 {dimension_numbers = #tpu.dot_dimension_numbers<[1], [0], [0], [1], [0, 0, 1, 1], [], []>} : vector<16x4xf32>, vector<4x128xf32>, vector<16x128xf32> -> vector<16x128xf32>
    %18 = arith.addf %15, %17 : vector<16x128xf32>
    %c0_12 = arith.constant 0 : index
    %c0_13 = arith.constant 0 : index
    %19 = vector.load %arg6[%c0_12, %c0_13] : memref<16x4xf32, #tpu.memory_space<vmem>>, vector<16x4xf32>
    %cst_14 = arith.constant dense<0.000000e+00> : vector<16x128xf32>
    %20 = tpu.matmul %19, %13, %cst_14 {dimension_numbers = #tpu.dot_dimension_numbers<[1], [0], [0], [1], [0, 0, 1, 1], [], []>} : vector<16x4xf32>, vector<4x128xf32>, vector<16x128xf32> -> vector<16x128xf32>
    %21 = arith.addf %18, %20 : vector<16x128xf32>
    %c0_15 = arith.constant 0 : index
    %c0_16 = arith.constant 0 : index
    %22 = vector.load %arg7[%c0_15, %c0_16] : memref<16x1xf32, #tpu.memory_space<vmem>>, vector<16x1xf32>
    %23 = vector.broadcast %22 : vector<16x1xf32> to vector<16x128xf32>
    %24 = arith.addf %21, %23 : vector<16x128xf32>
    %cst_17 = arith.constant 0.000000e+00 : f32
    %25 = vector.broadcast %cst_17 : f32 to vector<16x128xf32>
    %26 = arith.cmpf ogt, %24, %25 : vector<16x128xf32>
    %27 = math.exp %24 : vector<16x128xf32>
    %cst_18 = arith.constant 1.000000e+00 : f32
    %28 = vector.broadcast %cst_18 : f32 to vector<16x128xf32>
    %29 = arith.subf %27, %28 : vector<16x128xf32>
    %30 = arith.select %26, %24, %29 : vector<16x128xi1>, vector<16x128xf32>
    %c0_19 = arith.constant 0 : index
    %c0_20 = arith.constant 0 : index
    %31 = vector.load %arg8[%c0_19, %c0_20] : memref<16x16xf32, #tpu.memory_space<vmem>>, vector<16x16xf32>
    %cst_21 = arith.constant dense<0.000000e+00> : vector<16x128xf32>
    %32 = tpu.matmul %31, %30, %cst_21 {dimension_numbers = #tpu.dot_dimension_numbers<[1], [0], [0], [1], [0, 0, 1, 1], [], []>} : vector<16x16xf32>, vector<16x128xf32>, vector<16x128xf32> -> vector<16x128xf32>
    %c0_22 = arith.constant 0 : index
    %c0_23 = arith.constant 0 : index
    %33 = vector.load %arg9[%c0_22, %c0_23] : memref<16x1xf32, #tpu.memory_space<vmem>>, vector<16x1xf32>
    %34 = vector.broadcast %33 : vector<16x1xf32> to vector<16x128xf32>
    %35 = arith.addf %32, %34 : vector<16x128xf32>
    %cst_24 = arith.constant 0.000000e+00 : f32
    %36 = vector.broadcast %cst_24 : f32 to vector<16x128xf32>
    %37 = arith.cmpf ogt, %35, %36 : vector<16x128xf32>
    %38 = math.exp %35 : vector<16x128xf32>
    %cst_25 = arith.constant 1.000000e+00 : f32
    %39 = vector.broadcast %cst_25 : f32 to vector<16x128xf32>
    %40 = arith.subf %38, %39 : vector<16x128xf32>
    %41 = arith.select %37, %35, %40 : vector<16x128xi1>, vector<16x128xf32>
    %c0_26 = arith.constant 0 : index
    %c0_27 = arith.constant 0 : index
    %42 = vector.load %arg10[%c0_26, %c0_27] : memref<16x16xf32, #tpu.memory_space<vmem>>, vector<16x16xf32>
    %cst_28 = arith.constant dense<0.000000e+00> : vector<16x128xf32>
    %43 = tpu.matmul %42, %41, %cst_28 {dimension_numbers = #tpu.dot_dimension_numbers<[1], [0], [0], [1], [0, 0, 1, 1], [], []>} : vector<16x16xf32>, vector<16x128xf32>, vector<16x128xf32> -> vector<16x128xf32>
    %c0_29 = arith.constant 0 : index
    %c0_30 = arith.constant 0 : index
    %44 = vector.load %arg11[%c0_29, %c0_30] : memref<16x1xf32, #tpu.memory_space<vmem>>, vector<16x1xf32>
    %45 = vector.broadcast %44 : vector<16x1xf32> to vector<16x128xf32>
    %46 = arith.addf %43, %45 : vector<16x128xf32>
    %cst_31 = arith.constant 0.000000e+00 : f32
    %47 = vector.broadcast %cst_31 : f32 to vector<16x128xf32>
    %48 = arith.cmpf ogt, %46, %47 : vector<16x128xf32>
    %49 = math.exp %46 : vector<16x128xf32>
    %cst_32 = arith.constant 1.000000e+00 : f32
    %50 = vector.broadcast %cst_32 : f32 to vector<16x128xf32>
    %51 = arith.subf %49, %50 : vector<16x128xf32>
    %52 = arith.select %48, %46, %51 : vector<16x128xi1>, vector<16x128xf32>
    %c0_33 = arith.constant 0 : index
    %c0_34 = arith.constant 0 : index
    %53 = vector.load %arg12[%c0_33, %c0_34] : memref<16x16xf32, #tpu.memory_space<vmem>>, vector<16x16xf32>
    %cst_35 = arith.constant dense<0.000000e+00> : vector<16x128xf32>
    %54 = tpu.matmul %53, %52, %cst_35 {dimension_numbers = #tpu.dot_dimension_numbers<[1], [0], [0], [1], [0, 0, 1, 1], [], []>} : vector<16x16xf32>, vector<16x128xf32>, vector<16x128xf32> -> vector<16x128xf32>
    %c0_36 = arith.constant 0 : index
    %c0_37 = arith.constant 0 : index
    %55 = vector.load %arg13[%c0_36, %c0_37] : memref<16x1xf32, #tpu.memory_space<vmem>>, vector<16x1xf32>
    %56 = vector.broadcast %55 : vector<16x1xf32> to vector<16x128xf32>
    %57 = arith.addf %54, %56 : vector<16x128xf32>
    %cst_38 = arith.constant 0.000000e+00 : f32
    %58 = vector.broadcast %cst_38 : f32 to vector<16x128xf32>
    %59 = arith.cmpf ogt, %57, %58 : vector<16x128xf32>
    %60 = math.exp %57 : vector<16x128xf32>
    %cst_39 = arith.constant 1.000000e+00 : f32
    %61 = vector.broadcast %cst_39 : f32 to vector<16x128xf32>
    %62 = arith.subf %60, %61 : vector<16x128xf32>
    %63 = arith.select %59, %57, %62 : vector<16x128xi1>, vector<16x128xf32>
    %c0_40 = arith.constant 0 : index
    %c0_41 = arith.constant 0 : index
    %64 = vector.load %arg14[%c0_40, %c0_41] : memref<16x1xf32, #tpu.memory_space<vmem>>, vector<16x1xf32>
    %65 = vector.broadcast %64 : vector<16x1xf32> to vector<16x128xf32>
    %66 = arith.mulf %65, %63 : vector<16x128xf32>
    %cst_42 = arith.constant dense<0.000000e+00> : vector<128xf32>
    %67 = vector.multi_reduction <add>, %66, %cst_42 [0] : vector<16x128xf32> to vector<128xf32>
    %68 = vector.shape_cast %67 : vector<128xf32> to vector<1x128xf32>
    %c0_43 = arith.constant 0 : index
    %c0_44 = arith.constant 0 : index
    %69 = vector.load %arg15[%c0_43, %c0_44] : memref<1x1xf32, #tpu.memory_space<vmem>>, vector<1x1xf32>
    %70 = vector.broadcast %69 : vector<1x1xf32> to vector<1x128xf32>
    %71 = arith.addf %68, %70 : vector<1x128xf32>
    %c0_45 = arith.constant 0 : index
    %c0_46 = arith.constant 0 : index
    %72 = vector.load %arg16[%c0_45, %c0_46] : memref<1x128xf32, #tpu.memory_space<vmem>>, vector<1x128xf32>
    tpu.vector_store %arg16[%c0_45, %c0_46], %71 {strides = array<i32>} : memref<1x128xf32, #tpu.memory_space<vmem>>, vector<1x128xf32>,
    return
  }
  func.func @transform_0(%arg0: i32) -> (i32, i32) {
    %c0_i32 = arith.constant 0 : i32
    %c0_i32_0 = arith.constant 0 : i32
    return %c0_i32, %arg0 : i32, i32
  }
  func.func @transform_1(%arg0: i32) -> (i32, i32) {
    %c0_i32 = arith.constant 0 : i32
    %c0_i32_0 = arith.constant 0 : i32
    %c0_i32_1 = arith.constant 0 : i32
    return %c0_i32, %c0_i32_0 : i32, i32
  }
  func.func @transform_2(%arg0: i32) -> (i32, i32) {
    %c0_i32 = arith.constant 0 : i32
    %c0_i32_0 = arith.constant 0 : i32
    %c0_i32_1 = arith.constant 0 : i32
    return %c0_i32, %c0_i32_0 : i32, i32
  }
  func.func @transform_3(%arg0: i32) -> (i32, i32) {
    %c0_i32 = arith.constant 0 : i32
    %c0_i32_0 = arith.constant 0 : i32
    %c0_i32_1 = arith.constant 0 : i32
    return %c0_i32, %c0_i32_0 : i32, i32
  }
  func.func @transform_4(%arg0: i32) -> (i32, i32) {
    %c0_i32 = arith.constant 0 : i32
    %c0_i32_0 = arith.constant 0 : i32
    %c0_i32_1 = arith.constant 0 : i32
    return %c0_i32, %c0_i32_0 : i32, i32
  }
  func.func @transform_5(%arg0: i32) -> (i32, i32) {
    %c0_i32 = arith.constant 0 : i32
    %c0_i32_0 = arith.constant 0 : i32
    %c0_i32_1 = arith.constant 0 : i32
    return %c0_i32, %c0_i32_0 : i32, i32
  }
  func.func @transform_6(%arg0: i32) -> (i32, i32) {
    %c0_i32 = arith.constant 0 : i32
    %c0_i32_0 = arith.constant 0 : i32
    %c0_i32_1 = arith.constant 0 : i32
    return %c0_i32, %c0_i32_0 : i32, i32
  }
  func.func @transform_7(%arg0: i32) -> (i32, i32) {
    %c0_i32 = arith.constant 0 : i32
    %c0_i32_0 = arith.constant 0 : i32
    %c0_i32_1 = arith.constant 0 : i32
    return %c0_i32, %c0_i32_0 : i32, i32
  }
  func.func @transform_8(%arg0: i32) -> (i32, i32) {
    %c0_i32 = arith.constant 0 : i32
    %c0_i32_0 = arith.constant 0 : i32
    %c0_i32_1 = arith.constant 0 : i32
    return %c0_i32, %c0_i32_0 : i32, i32
  }
  func.func @transform_9(%arg0: i32) -> (i32, i32) {
    %c0_i32 = arith.constant 0 : i32
    %c0_i32_0 = arith.constant 0 : i32
    %c0_i32_1 = arith.constant 0 : i32
    return %c0_i32, %c0_i32_0 : i32, i32
  }
  func.func @transform_10(%arg0: i32) -> (i32, i32) {
    %c0_i32 = arith.constant 0 : i32
    %c0_i32_0 = arith.constant 0 : i32
    %c0_i32_1 = arith.constant 0 : i32
    return %c0_i32, %c0_i32_0 : i32, i32
  }
  func.func @transform_11(%arg0: i32) -> (i32, i32) {
    %c0_i32 = arith.constant 0 : i32
    %c0_i32_0 = arith.constant 0 : i32
    %c0_i32_1 = arith.constant 0 : i32
    return %c0_i32, %c0_i32_0 : i32, i32
  }
  func.func @transform_12(%arg0: i32) -> (i32, i32) {
    %c0_i32 = arith.constant 0 : i32
    %c0_i32_0 = arith.constant 0 : i32
    %c0_i32_1 = arith.constant 0 : i32
    return %c0_i32, %c0_i32_0 : i32, i32
  }
  func.func @transform_13(%arg0: i32) -> (i32, i32) {
    %c0_i32 = arith.constant 0 : i32
    %c0_i32_0 = arith.constant 0 : i32
    %c0_i32_1 = arith.constant 0 : i32
    return %c0_i32, %c0_i32_0 : i32, i32
  }
  func.func @transform_14(%arg0: i32) -> (i32, i32) {
    %c0_i32 = arith.constant 0 : i32
    %c0_i32_0 = arith.constant 0 : i32
    %c0_i32_1 = arith.constant 0 : i32
    return %c0_i32, %c0_i32_0 : i32, i32
  }
  func.func @transform_15(%arg0: i32) -> (i32, i32) {
    %c0_i32 = arith.constant 0 : i32
    %c0_i32_0 = arith.constant 0 : i32
    return %c0_i32, %arg0 : i32, i32
  }
}

</mosaic_0001>

<llo_original>
// kernel: tpu_custom_call.1
$region0: #{tpu_custom_call.1}
  #allocation0 [shape = 'u32[]', space=smem, size = 0x4, offset = 0x4, fixed_abs, tag = 'smem constant byte address 0x4 - core index']
  #allocation1 [shape = 'u32[144,128]{1,0:T(1,128)}', space=vmem, size = 0x12000, scoped, tag = 'internal scratch']
  #allocation2 [shape = 'f32[1,1]{1,0:T(1,128)S(1)}', space=vmem, size = 0x200, scoped, tag = 'scoped memory for tpu_custom_call.1']
  %s0 = inlined_call_operand.vmem [shape: f32[10,256], index: 0, kind: input, shape index: {}]
  %s1 = inlined_call_operand.vmem [shape: f32[4,1], index: 1, kind: input, shape index: {}]
  %s2 = inlined_call_operand.vmem [shape: f32[4,1], index: 2, kind: input, shape index: {}]
  %s3 = inlined_call_operand.vmem [shape: f32[16,8], index: 3, kind: input, shape index: {}]
  %s4 = inlined_call_operand.vmem [shape: f32[16,4], index: 4, kind: input, shape index: {}]
  %s5 = inlined_call_operand.vmem [shape: f32[16,4], index: 5, kind: input, shape index: {}]
  %s6 = inlined_call_operand.vmem [shape: f32[16,1], index: 6, kind: input, shape index: {}]
  %s7 = inlined_call_operand.vmem [shape: f32[16,16], index: 7, kind: input, shape index: {}]
  %s8 = inlined_call_operand.vmem [shape: f32[16,1], index: 8, kind: input, shape index: {}]
  %s9 = inlined_call_operand.vmem [shape: f32[16,16], index: 9, kind: input, shape index: {}]
  %s10 = inlined_call_operand.vmem [shape: f32[16,1], index: 10, kind: input, shape index: {}]
  %s11 = inlined_call_operand.vmem [shape: f32[16,16], index: 11, kind: input, shape index: {}]
  %s12 = inlined_call_operand.vmem [shape: f32[16,1], index: 12, kind: input, shape index: {}]
  %s13 = inlined_call_operand.vmem [shape: f32[16,1], index: 13, kind: input, shape index: {}]
  %s14 = inlined_call_operand.<no memory space> [shape: f32[1,1], index: 14, kind: input, shape index: {}]
  %s15 = inlined_call_operand.hbm [shape: f32[1,256], index: 15, kind: output, shape index: {}]
  %s16 = sld [smem:[#allocation0]]
  $region131: #{tpu_custom_call.1} parent=0
    _
  %s18 = ssub.s32 1, %s16
  %s19 = scalar_select 0, %s18, %s16
  %v20 = vstv %s14
  %21 = vst [vmem:[#allocation2] sm:$0x1] %v20
  $region1: #{tpu_custom_call.1} parent=0
    #allocation3 [shape = 'u8[16384]{0}', space=vmem, size = 0x4000, scoped, tag = 'input window, operand 0']
    #allocation4 [shape = 'u8[1024]{0}', space=vmem, size = 0x400, scoped, tag = 'output window, operand 0']
    #allocation5 [shape = 's32[2]{0}', space=sflag, size = 0x8, scoped, tag = 'scoped memory for tpu_custom_call.1']
    %22 = vsyncpa [#allocation5], 0
    %s23 = scalar_lea.sflag [#allocation5], 1
    %24 = vsyncpa %s23, 0
    loop: start=0, step=1, limit=4
    $region2: #{tpu_custom_call.1} parent=1 // loop_pre_header
      _
    $region3: #{tpu_custom_call.1} parent=1 // loop_header
      %s26 = sphi 0, %s30
      %p27 = scmp.ge.s32.totalorder %s26, 4
      %s36 = sphi 0, %s38
      %s39 = sphi 0, %s36
      %s40 = sphi 0, %s39
      %s56 = sphi 0, %s40
      %s60 = sphi 0, %s60
      %s62 = sphi 0, %s60
      %s63 = sphi 0, %s62
      %s77 = sphi 0, %s63
      %s81 = sphi 0, %s81
      %s83 = sphi 0, %s81
      %s84 = sphi 0, %s83
      %s98 = sphi 0, %s84
      %s102 = sphi 0, %s102
      %s104 = sphi 0, %s102
      %s105 = sphi 0, %s104
      %s119 = sphi 0, %s105
      %s123 = sphi 0, %s123
      %s125 = sphi 0, %s123
      %s126 = sphi 0, %s125
      %s140 = sphi 0, %s126
      %s144 = sphi 0, %s144
      %s146 = sphi 0, %s144
      %s147 = sphi 0, %s146
      %s161 = sphi 0, %s147
      %s165 = sphi 0, %s165
      %s167 = sphi 0, %s165
      %s168 = sphi 0, %s167
      %s182 = sphi 0, %s168
      %s186 = sphi 0, %s186
      %s188 = sphi 0, %s186
      %s189 = sphi 0, %s188
      %s203 = sphi 0, %s189
      %s207 = sphi 0, %s207
      %s209 = sphi 0, %s207
      %s210 = sphi 0, %s209
      %s224 = sphi 0, %s210
      %s228 = sphi 0, %s228
      %s230 = sphi 0, %s228
      %s231 = sphi 0, %s230
      %s245 = sphi 0, %s231
      %s249 = sphi 0, %s249
      %s251 = sphi 0, %s249
      %s252 = sphi 0, %s251
      %s266 = sphi 0, %s252
      %s270 = sphi 0, %s270
      %s272 = sphi 0, %s270
      %s273 = sphi 0, %s272
      %s287 = sphi 0, %s273
      %s291 = sphi 0, %s291
      %s293 = sphi 0, %s291
      %s294 = sphi 0, %s293
      %s308 = sphi 0, %s294
      %s312 = sphi 0, %s312
      %s314 = sphi 0, %s312
      %s315 = sphi 0, %s314
      %s329 = sphi 0, %s315
      %s333 = sphi 0, %s333
      %s335 = sphi 0, %s333
      %s336 = sphi 0, %s335
      %s350 = sphi 0, %s336
      %s356 = sphi 0, %s358
      %s359 = sphi 0, %s356
      %s360 = sphi 0, %s359
      %s376 = sphi 0, %s360
    $region4: #{tpu_custom_call.1} parent=1 // loop_header_branch
      %29 = sbr.rel (%p27) target = $region8
    $region5: #{tpu_custom_call.1} parent=1 // loop_body
      %s31 = ssub.s32 %s26, 1
      %s32 = ssub.s32 %s26, 2
      %s33 = sadd.s32 %s26, 1
      %s34 = ssub.s32 %s26, %s33
      %p35 = scmp.eq.s32.totalorder %s34, 0
      %s37 = sadd.s32 %s36, 1
      %s38 = scalar_select %p35, %s36, %s37
      %p41 = pneg %p35
      %p42 = scmp.eq.s32.totalorder %s26, 1
      %p43 = por %p41, %p42
      %p44 = scmp.ne.s32.totalorder %s36, %s39
      %p45 = scmp.eq.s32.totalorder %s26, 0
      %p46 = por %p44, %p45
      %p47 = scmp.ne.s32.totalorder %s36, %s39
      %p48 = scmp.eq.s32.totalorder %s31, 1
      %p49 = por %p47, %p48
      %p50 = scmp.ne.s32.totalorder %s39, %s40
      %p51 = scmp.eq.s32.totalorder %s31, 0
      %p52 = por %p50, %p51
      %p53 = scmp.ne.s32.totalorder %s39, %s40
      %p54 = scmp.eq.s32.totalorder %s32, 1
      %p55 = por %p53, %p54
      %p57 = scmp.ne.s32.totalorder %s40, %s56
      %p58 = scmp.eq.s32.totalorder %s32, 0
      %p59 = por %p57, %p58
      %s61 = sadd.s32 %s60, 1
      %p64 = scmp.eq.s32.totalorder %s26, 1
      %p65 = scmp.ne.s32.totalorder %s60, %s62
      %p66 = scmp.eq.s32.totalorder %s26, 0
      %p67 = por %p65, %p66
      %p68 = scmp.ne.s32.totalorder %s60, %s62
      %p69 = scmp.eq.s32.totalorder %s31, 1
      %p70 = por %p68, %p69
      %p71 = scmp.ne.s32.totalorder %s62, %s63
      %p72 = scmp.eq.s32.totalorder %s31, 0
      %p73 = por %p71, %p72
      %p74 = scmp.ne.s32.totalorder %s62, %s63
      %p75 = scmp.eq.s32.totalorder %s32, 1
      %p76 = por %p74, %p75
      %p78 = scmp.ne.s32.totalorder %s63, %s77
      %p79 = scmp.eq.s32.totalorder %s32, 0
      %p80 = por %p78, %p79
      %s82 = sadd.s32 %s81, 1
      %p85 = scmp.eq.s32.totalorder %s26, 1
      %p86 = scmp.ne.s32.totalorder %s81, %s83
      %p87 = scmp.eq.s32.totalorder %s26, 0
      %p88 = por %p86, %p87
      %p89 = scmp.ne.s32.totalorder %s81, %s83
      %p90 = scmp.eq.s32.totalorder %s31, 1
      %p91 = por %p89, %p90
      %p92 = scmp.ne.s32.totalorder %s83, %s84
      %p93 = scmp.eq.s32.totalorder %s31, 0
      %p94 = por %p92, %p93
      %p95 = scmp.ne.s32.totalorder %s83, %s84
      %p96 = scmp.eq.s32.totalorder %s32, 1
      %p97 = por %p95, %p96
      %p99 = scmp.ne.s32.totalorder %s84, %s98
      %p100 = scmp.eq.s32.totalorder %s32, 0
      %p101 = por %p99, %p100
      %s103 = sadd.s32 %s102, 1
      %p106 = scmp.eq.s32.totalorder %s26, 1
      %p107 = scmp.ne.s32.totalorder %s102, %s104
      %p108 = scmp.eq.s32.totalorder %s26, 0
      %p109 = por %p107, %p108
      %p110 = scmp.ne.s32.totalorder %s102, %s104
      %p111 = scmp.eq.s32.totalorder %s31, 1
      %p112 = por %p110, %p111
      %p113 = scmp.ne.s32.totalorder %s104, %s105
      %p114 = scmp.eq.s32.totalorder %s31, 0
      %p115 = por %p113, %p114
      %p116 = scmp.ne.s32.totalorder %s104, %s105
      %p117 = scmp.eq.s32.totalorder %s32, 1
      %p118 = por %p116, %p117
      %p120 = scmp.ne.s32.totalorder %s105, %s119
      %p121 = scmp.eq.s32.totalorder %s32, 0
      %p122 = por %p120, %p121
      %s124 = sadd.s32 %s123, 1
      %p127 = scmp.eq.s32.totalorder %s26, 1
      %p128 = scmp.ne.s32.totalorder %s123, %s125
      %p129 = scmp.eq.s32.totalorder %s26, 0
      %p130 = por %p128, %p129
      %p131 = scmp.ne.s32.totalorder %s123, %s125
      %p132 = scmp.eq.s32.totalorder %s31, 1
      %p133 = por %p131, %p132
      %p134 = scmp.ne.s32.totalorder %s125, %s126
      %p135 = scmp.eq.s32.totalorder %s31, 0
      %p136 = por %p134, %p135
      %p137 = scmp.ne.s32.totalorder %s125, %s126
      %p138 = scmp.eq.s32.totalorder %s32, 1
      %p139 = por %p137, %p138
      %p141 = scmp.ne.s32.totalorder %s126, %s140
      %p142 = scmp.eq.s32.totalorder %s32, 0
      %p143 = por %p141, %p142
      %s145 = sadd.s32 %s144, 1
      %p148 = scmp.eq.s32.totalorder %s26, 1
      %p149 = scmp.ne.s32.totalorder %s144, %s146
      %p150 = scmp.eq.s32.totalorder %s26, 0
      %p151 = por %p149, %p150
      %p152 = scmp.ne.s32.totalorder %s144, %s146
      %p153 = scmp.eq.s32.totalorder %s31, 1
      %p154 = por %p152, %p153
      %p155 = scmp.ne.s32.totalorder %s146, %s147
      %p156 = scmp.eq.s32.totalorder %s31, 0
      %p157 = por %p155, %p156
      %p158 = scmp.ne.s32.totalorder %s146, %s147
      %p159 = scmp.eq.s32.totalorder %s32, 1
      %p160 = por %p158, %p159
      %p162 = scmp.ne.s32.totalorder %s147, %s161
      %p163 = scmp.eq.s32.totalorder %s32, 0
      %p164 = por %p162, %p163
      %s166 = sadd.s32 %s165, 1
      %p169 = scmp.eq.s32.totalorder %s26, 1
      %p170 = scmp.ne.s32.totalorder %s165, %s167
      %p171 = scmp.eq.s32.totalorder %s26, 0
      %p172 = por %p170, %p171
      %p173 = scmp.ne.s32.totalorder %s165, %s167
      %p174 = scmp.eq.s32.totalorder %s31, 1
      %p175 = por %p173, %p174
      %p176 = scmp.ne.s32.totalorder %s167, %s168
      %p177 = scmp.eq.s32.totalorder %s31, 0
      %p178 = por %p176, %p177
      %p179 = scmp.ne.s32.totalorder %s167, %s168
      %p180 = scmp.eq.s32.totalorder %s32, 1
      %p181 = por %p179, %p180
      %p183 = scmp.ne.s32.totalorder %s168, %s182
      %p184 = scmp.eq.s32.totalorder %s32, 0
      %p185 = por %p183, %p184
      %s187 = sadd.s32 %s186, 1
      %p190 = scmp.eq.s32.totalorder %s26, 1
      %p191 = scmp.ne.s32.totalorder %s186, %s188
      %p192 = scmp.eq.s32.totalorder %s26, 0
      %p193 = por %p191, %p192
      %p194 = scmp.ne.s32.totalorder %s186, %s188
      %p195 = scmp.eq.s32.totalorder %s31, 1
      %p196 = por %p194, %p195
      %p197 = scmp.ne.s32.totalorder %s188, %s189
      %p198 = scmp.eq.s32.totalorder %s31, 0
      %p199 = por %p197, %p198
      %p200 = scmp.ne.s32.totalorder %s188, %s189
      %p201 = scmp.eq.s32.totalorder %s32, 1
      %p202 = por %p200, %p201
      %p204 = scmp.ne.s32.totalorder %s189, %s203
      %p205 = scmp.eq.s32.totalorder %s32, 0
      %p206 = por %p204, %p205
      %s208 = sadd.s32 %s207, 1
      %p211 = scmp.eq.s32.totalorder %s26, 1
      %p212 = scmp.ne.s32.totalorder %s207, %s209
      %p213 = scmp.eq.s32.totalorder %s26, 0
      %p214 = por %p212, %p213
      %p215 = scmp.ne.s32.totalorder %s207, %s209
      %p216 = scmp.eq.s32.totalorder %s31, 1
      %p217 = por %p215, %p216
      %p218 = scmp.ne.s32.totalorder %s209, %s210
      %p219 = scmp.eq.s32.totalorder %s31, 0
      %p220 = por %p218, %p219
      %p221 = scmp.ne.s32.totalorder %s209, %s210
      %p222 = scmp.eq.s32.totalorder %s32, 1
      %p223 = por %p221, %p222
      %p225 = scmp.ne.s32.totalorder %s210, %s224
      %p226 = scmp.eq.s32.totalorder %s32, 0
      %p227 = por %p225, %p226
      %s229 = sadd.s32 %s228, 1
      %p232 = scmp.eq.s32.totalorder %s26, 1
      %p233 = scmp.ne.s32.totalorder %s228, %s230
      %p234 = scmp.eq.s32.totalorder %s26, 0
      %p235 = por %p233, %p234
      %p236 = scmp.ne.s32.totalorder %s228, %s230
      %p237 = scmp.eq.s32.totalorder %s31, 1
      %p238 = por %p236, %p237
      %p239 = scmp.ne.s32.totalorder %s230, %s231
      %p240 = scmp.eq.s32.totalorder %s31, 0
      %p241 = por %p239, %p240
      %p242 = scmp.ne.s32.totalorder %s230, %s231
      %p243 = scmp.eq.s32.totalorder %s32, 1
      %p244 = por %p242, %p243
      %p246 = scmp.ne.s32.totalorder %s231, %s245
      %p247 = scmp.eq.s32.totalorder %s32, 0
      %p248 = por %p246, %p247
      %s250 = sadd.s32 %s249, 1
      %p253 = scmp.eq.s32.totalorder %s26, 1
      %p254 = scmp.ne.s32.totalorder %s249, %s251
      %p255 = scmp.eq.s32.totalorder %s26, 0
      %p256 = por %p254, %p255
      %p257 = scmp.ne.s32.totalorder %s249, %s251
      %p258 = scmp.eq.s32.totalorder %s31, 1
      %p259 = por %p257, %p258
      %p260 = scmp.ne.s32.totalorder %s251, %s252
      %p261 = scmp.eq.s32.totalorder %s31, 0
      %p262 = por %p260, %p261
      %p263 = scmp.ne.s32.totalorder %s251, %s252
      %p264 = scmp.eq.s32.totalorder %s32, 1
      %p265 = por %p263, %p264
      %p267 = scmp.ne.s32.totalorder %s252, %s266
      %p268 = scmp.eq.s32.totalorder %s32, 0
      %p269 = por %p267, %p268
      %s271 = sadd.s32 %s270, 1
      %p274 = scmp.eq.s32.totalorder %s26, 1
      %p275 = scmp.ne.s32.totalorder %s270, %s272
      %p276 = scmp.eq.s32.totalorder %s26, 0
      %p277 = por %p275, %p276
      %p278 = scmp.ne.s32.totalorder %s270, %s272
      %p279 = scmp.eq.s32.totalorder %s31, 1
      %p280 = por %p278, %p279
      %p281 = scmp.ne.s32.totalorder %s272, %s273
      %p282 = scmp.eq.s32.totalorder %s31, 0
      %p283 = por %p281, %p282
      %p284 = scmp.ne.s32.totalorder %s272, %s273
      %p285 = scmp.eq.s32.totalorder %s32, 1
      %p286 = por %p284, %p285
      %p288 = scmp.ne.s32.totalorder %s273, %s287
      %p289 = scmp.eq.s32.totalorder %s32, 0
      %p290 = por %p288, %p289
      %s292 = sadd.s32 %s291, 1
      %p295 = scmp.eq.s32.totalorder %s26, 1
      %p296 = scmp.ne.s32.totalorder %s291, %s293
      %p297 = scmp.eq.s32.totalorder %s26, 0
      %p298 = por %p296, %p297
      %p299 = scmp.ne.s32.totalorder %s291, %s293
      %p300 = scmp.eq.s32.totalorder %s31, 1
      %p301 = por %p299, %p300
      %p302 = scmp.ne.s32.totalorder %s293, %s294
      %p303 = scmp.eq.s32.totalorder %s31, 0
      %p304 = por %p302, %p303
      %p305 = scmp.ne.s32.totalorder %s293, %s294
      %p306 = scmp.eq.s32.totalorder %s32, 1
      %p307 = por %p305, %p306
      %p309 = scmp.ne.s32.totalorder %s294, %s308
      %p310 = scmp.eq.s32.totalorder %s32, 0
      %p311 = por %p309, %p310
      %s313 = sadd.s32 %s312, 1
      %p316 = scmp.eq.s32.totalorder %s26, 1
      %p317 = scmp.ne.s32.totalorder %s312, %s314
      %p318 = scmp.eq.s32.totalorder %s26, 0
      %p319 = por %p317, %p318
      %p320 = scmp.ne.s32.totalorder %s312, %s314
      %p321 = scmp.eq.s32.totalorder %s31, 1
      %p322 = por %p320, %p321
      %p323 = scmp.ne.s32.totalorder %s314, %s315
      %p324 = scmp.eq.s32.totalorder %s31, 0
      %p325 = por %p323, %p324
      %p326 = scmp.ne.s32.totalorder %s314, %s315
      %p327 = scmp.eq.s32.totalorder %s32, 1
      %p328 = por %p326, %p327
      %p330 = scmp.ne.s32.totalorder %s315, %s329
      %p331 = scmp.eq.s32.totalorder %s32, 0
      %p332 = por %p330, %p331
      %s334 = sadd.s32 %s333, 1
      %p337 = scmp.eq.s32.totalorder %s26, 1
      %p338 = scmp.ne.s32.totalorder %s333, %s335
      %p339 = scmp.eq.s32.totalorder %s26, 0
      %p340 = por %p338, %p339
      %p341 = scmp.ne.s32.totalorder %s333, %s335
      %p342 = scmp.eq.s32.totalorder %s31, 1
      %p343 = por %p341, %p342
      %p344 = scmp.ne.s32.totalorder %s335, %s336
      %p345 = scmp.eq.s32.totalorder %s31, 0
      %p346 = por %p344, %p345
      %p347 = scmp.ne.s32.totalorder %s335, %s336
      %p348 = scmp.eq.s32.totalorder %s32, 1
      %p349 = por %p347, %p348
      %p351 = scmp.ne.s32.totalorder %s336, %s350
      %p352 = scmp.eq.s32.totalorder %s32, 0
      %p353 = por %p351, %p352
      %s354 = ssub.s32 %s26, %s33
      %p355 = scmp.eq.s32.totalorder %s354, 0
      %s357 = sadd.s32 %s356, 1
      %s358 = scalar_select %p355, %s356, %s357
      %p361 = pneg %p355
      %p362 = scmp.eq.s32.totalorder %s26, 1
      %p363 = por %p361, %p362
      %p364 = scmp.ne.s32.totalorder %s356, %s359
      %p365 = scmp.eq.s32.totalorder %s26, 0
      %p366 = por %p364, %p365
      %p367 = scmp.ne.s32.totalorder %s356, %s359
      %p368 = scmp.eq.s32.totalorder %s31, 1
      %p369 = por %p367, %p368
      %p370 = scmp.ne.s32.totalorder %s359, %s360
      %p371 = scmp.eq.s32.totalorder %s31, 0
      %p372 = por %p370, %p371
      %p373 = scmp.ne.s32.totalorder %s359, %s360
      %p374 = scmp.eq.s32.totalorder %s32, 1
      %p375 = por %p373, %p374
      %p377 = scmp.ne.s32.totalorder %s360, %s376
      %p378 = scmp.eq.s32.totalorder %s32, 0
      %p379 = por %p377, %p378
      %p380 = scmp.le.s32.totalorder 1, %s26
      %p381 = scmp.lt.s32.totalorder %s26, 3
      %p382 = pnand %p380, %p381
      %p383 = pneg %p382
      // Predicated region
      $region9: #{tpu_custom_call.1} parent=5 // pred_check
        _
      $region10: #{tpu_custom_call.1} parent=5 // pred_check_branch
        %385 = sbr.rel (%p382) target = $region12
      $region11: #{tpu_custom_call.1} parent=5 // pred_region
        %s386 = ssub.s32 %s26, 1
        // Predicated region
        $region13: #{tpu_custom_call.1} parent=11 // pred_check
          %p387 = pneg %p73
        $region14: #{tpu_custom_call.1} parent=11 // pred_check_branch
          %389 = sbr.rel (%p387) target = $region16
        $region15: #{tpu_custom_call.1} parent=11 // pred_region
          _
        $region16: #{tpu_custom_call.1} parent=11 // pred_fallthru
          _
        // Predicated region
        $region17: #{tpu_custom_call.1} parent=11 // pred_check
          %p390 = pneg %p94
        $region18: #{tpu_custom_call.1} parent=11 // pred_check_branch
          %392 = sbr.rel (%p390) target = $region20
        $region19: #{tpu_custom_call.1} parent=11 // pred_region
          _
        $region20: #{tpu_custom_call.1} parent=11 // pred_fallthru
          _
        // Predicated region
        $region21: #{tpu_custom_call.1} parent=11 // pred_check
          %p393 = pneg %p115
        $region22: #{tpu_custom_call.1} parent=11 // pred_check_branch
          %395 = sbr.rel (%p393) target = $region24
        $region23: #{tpu_custom_call.1} parent=11 // pred_region
          _
        $region24: #{tpu_custom_call.1} parent=11 // pred_fallthru
          _
        // Predicated region
        $region25: #{tpu_custom_call.1} parent=11 // pred_check
          %p396 = pneg %p136
        $region26: #{tpu_custom_call.1} parent=11 // pred_check_branch
          %398 = sbr.rel (%p396) target = $region28
        $region27: #{tpu_custom_call.1} parent=11 // pred_region
          _
        $region28: #{tpu_custom_call.1} parent=11 // pred_fallthru
          _
        // Predicated region
        $region29: #{tpu_custom_call.1} parent=11 // pred_check
          %p399 = pneg %p157
        $region30: #{tpu_custom_call.1} parent=11 // pred_check_branch
          %401 = sbr.rel (%p399) target = $region32
        $region31: #{tpu_custom_call.1} parent=11 // pred_region
          _
        $region32: #{tpu_custom_call.1} parent=11 // pred_fallthru
          _
        // Predicated region
        $region33: #{tpu_custom_call.1} parent=11 // pred_check
          %p402 = pneg %p178
        $region34: #{tpu_custom_call.1} parent=11 // pred_check_branch
          %404 = sbr.rel (%p402) target = $region36
        $region35: #{tpu_custom_call.1} parent=11 // pred_region
          _
        $region36: #{tpu_custom_call.1} parent=11 // pred_fallthru
          _
        // Predicated region
        $region37: #{tpu_custom_call.1} parent=11 // pred_check
          %p405 = pneg %p199
        $region38: #{tpu_custom_call.1} parent=11 // pred_check_branch
          %407 = sbr.rel (%p405) target = $region40
        $region39: #{tpu_custom_call.1} parent=11 // pred_region
          _
        $region40: #{tpu_custom_call.1} parent=11 // pred_fallthru
          _
        // Predicated region
        $region41: #{tpu_custom_call.1} parent=11 // pred_check
          %p408 = pneg %p220
        $region42: #{tpu_custom_call.1} parent=11 // pred_check_branch
          %410 = sbr.rel (%p408) target = $region44
        $region43: #{tpu_custom_call.1} parent=11 // pred_region
          _
        $region44: #{tpu_custom_call.1} parent=11 // pred_fallthru
          _
        // Predicated region
        $region45: #{tpu_custom_call.1} parent=11 // pred_check
          %p411 = pneg %p241
        $region46: #{tpu_custom_call.1} parent=11 // pred_check_branch
          %413 = sbr.rel (%p411) target = $region48
        $region47: #{tpu_custom_call.1} parent=11 // pred_region
          _
        $region48: #{tpu_custom_call.1} parent=11 // pred_fallthru
          _
        // Predicated region
        $region49: #{tpu_custom_call.1} parent=11 // pred_check
          %p414 = pneg %p262
        $region50: #{tpu_custom_call.1} parent=11 // pred_check_branch
          %416 = sbr.rel (%p414) target = $region52
        $region51: #{tpu_custom_call.1} parent=11 // pred_region
          _
        $region52: #{tpu_custom_call.1} parent=11 // pred_fallthru
          _
        // Predicated region
        $region53: #{tpu_custom_call.1} parent=11 // pred_check
          %p417 = pneg %p283
        $region54: #{tpu_custom_call.1} parent=11 // pred_check_branch
          %419 = sbr.rel (%p417) target = $region56
        $region55: #{tpu_custom_call.1} parent=11 // pred_region
          _
        $region56: #{tpu_custom_call.1} parent=11 // pred_fallthru
          _
        // Predicated region
        $region57: #{tpu_custom_call.1} parent=11 // pred_check
          %p420 = pneg %p304
        $region58: #{tpu_custom_call.1} parent=11 // pred_check_branch
          %422 = sbr.rel (%p420) target = $region60
        $region59: #{tpu_custom_call.1} parent=11 // pred_region
          _
        $region60: #{tpu_custom_call.1} parent=11 // pred_fallthru
          _
        // Predicated region
        $region61: #{tpu_custom_call.1} parent=11 // pred_check
          %p423 = pneg %p325
        $region62: #{tpu_custom_call.1} parent=11 // pred_check_branch
          %425 = sbr.rel (%p423) target = $region64
        $region63: #{tpu_custom_call.1} parent=11 // pred_region
          _
        $region64: #{tpu_custom_call.1} parent=11 // pred_fallthru
          _
        // Predicated region
        $region65: #{tpu_custom_call.1} parent=11 // pred_check
          %p426 = pneg %p346
        $region66: #{tpu_custom_call.1} parent=11 // pred_check_branch
          %428 = sbr.rel (%p426) target = $region68
        $region67: #{tpu_custom_call.1} parent=11 // pred_region
          _
        $region68: #{tpu_custom_call.1} parent=11 // pred_fallthru
          _
      $region12: #{tpu_custom_call.1} parent=5 // pred_fallthru
        _
      %p429 = scmp.lt.s32.totalorder %s26, 2
      // Predicated region
      $region69: #{tpu_custom_call.1} parent=5 // pred_check
        %p430 = pneg %p429
      $region70: #{tpu_custom_call.1} parent=5 // pred_check_branch
        %432 = sbr.rel (%p430) target = $region72
      $region71: #{tpu_custom_call.1} parent=5 // pred_region
        // Predicated region
        $region73: #{tpu_custom_call.1} parent=71 // pred_check
          %p433 = pneg %p46
        $region74: #{tpu_custom_call.1} parent=71 // pred_check_branch
          %435 = sbr.rel (%p433) target = $region76
        $region75: #{tpu_custom_call.1} parent=71 // pred_region
          %s436 = sand.u32 %s36, 1
          %s437 = sand.u32 %s36, 1
          %s438 = smul.addr %s437, 16
          %s439 = scalar_lea.vmem [#allocation3], %s438
          %s440 = smul.addr %s26, 8
          %s441 = scalar_lea.vmem %s0, %s440
          // Predicated region
          $region77: #{tpu_custom_call.1} parent=75 // pred_check
            _
          $region78: #{tpu_custom_call.1} parent=75 // pred_check_branch
            %443 = sbr.rel (0) target = $region80
          $region79: #{tpu_custom_call.1} parent=75 // pred_region
            // Predicated region
            $region81: #{tpu_custom_call.1} parent=79 // pred_check
              _
            $region82: #{tpu_custom_call.1} parent=79 // pred_check_branch
              %445 = sbr.rel (0) target = $region84
            $region83: #{tpu_custom_call.1} parent=79 // pred_region
              // Predicated region
              $region96: #{tpu_custom_call.1} parent=83 // pred_check
                _
              $region97: #{tpu_custom_call.1} parent=83 // pred_check_branch
                %463 = sbr.rel (0) target = $region99
              $region98: #{tpu_custom_call.1} parent=83 // pred_region
                loop: start=0, step=1, limit=1
                $region100: #{tpu_custom_call.1} parent=98 // loop_pre_header
                  _
                $region101: #{tpu_custom_call.1} parent=98 // loop_header
                  %s465 = sphi 0, %s469
                  %p466 = scmp.ge.s32.totalorder %s465, 1
                  %s470 = sphi %s441, %s441
                  %s471 = sphi %s439, %s439
                $region102: #{tpu_custom_call.1} parent=98 // loop_header_branch
                  %468 = sbr.rel (%p466) target = $region106
                $region103: #{tpu_custom_call.1} parent=98 // loop_body
                  %v472 = vld [vmem:[%s470] sm:$0xff]
                  %473 = vst [vmem:[%s471] sm:$0xff] %v472
                  %v474 = vld [vmem:[%s470 + $0x10] sm:$0xff]
                  %475 = vst [vmem:[%s471 + $0x8] sm:$0xff] %v474
                $region104: #{tpu_custom_call.1} parent=98 // loop_footer
                  %s469 = sadd.s32 1, %s465
                $region105: #{tpu_custom_call.1} parent=98 // loop_footer_branch
                  %464 = sbr.rel target = $region101
                $region106: #{tpu_custom_call.1} parent=98 // loop_exit
                  _
              $region99: #{tpu_custom_call.1} parent=83 // pred_fallthru
                _
              // Predicated region
              $region107: #{tpu_custom_call.1} parent=83 // pred_check
                _
              $region108: #{tpu_custom_call.1} parent=83 // pred_check_branch
                %477 = sbr.rel target = $region110
              $region109: #{tpu_custom_call.1} parent=83 // pred_region
                _
              $region110: #{tpu_custom_call.1} parent=83 // pred_fallthru
                _
            $region84: #{tpu_custom_call.1} parent=79 // pred_fallthru
              _
            // Predicated region
            $region85: #{tpu_custom_call.1} parent=79 // pred_check
              _
            $region86: #{tpu_custom_call.1} parent=79 // pred_check_branch
              %447 = sbr.rel target = $region88
            $region87: #{tpu_custom_call.1} parent=79 // pred_region
              %s449 = ssub.s32 256, 1
              loop: start=0, step=1, limit=1
              $region89: #{tpu_custom_call.1} parent=87 // loop_pre_header
                _
              $region90: #{tpu_custom_call.1} parent=87 // loop_header
                %s451 = sphi 0, %s455
                %p452 = scmp.ge.s32.totalorder %s451, 1
                %s456 = sphi %s441, %s441
                %s457 = sphi %s439, %s439
              $region91: #{tpu_custom_call.1} parent=87 // loop_header_branch
                %454 = sbr.rel (%p452) target = $region95
              $region92: #{tpu_custom_call.1} parent=87 // loop_body
                %v458 = vld [vmem:[%s456] sm:%s449]
                %459 = vst [vmem:[%s457] sm:%s449] %v458
                %v460 = vld [vmem:[%s456 + $0x10] sm:%s449]
                %461 = vst [vmem:[%s457 + $0x8] sm:%s449] %v460
              $region93: #{tpu_custom_call.1} parent=87 // loop_footer
                %s455 = sadd.s32 1, %s451
              $region94: #{tpu_custom_call.1} parent=87 // loop_footer_branch
                %450 = sbr.rel target = $region90
              $region95: #{tpu_custom_call.1} parent=87 // loop_exit
                _
            $region88: #{tpu_custom_call.1} parent=79 // pred_fallthru
              _
          $region80: #{tpu_custom_call.1} parent=75 // pred_fallthru
            _
          %478 = vnop
        $region76: #{tpu_custom_call.1} parent=71 // pred_fallthru
          _
      $region72: #{tpu_custom_call.1} parent=5 // pred_fallthru
        _
      %p479 = scmp.le.s32.totalorder 1, %s26
      %p480 = scmp.lt.s32.totalorder %s26, 3
      %p481 = pnand %p479, %p480
      %p482 = pneg %p481
      // Predicated region
      $region111: #{tpu_custom_call.1} parent=5 // pred_check
        _
      $region112: #{tpu_custom_call.1} parent=5 // pred_check_branch
        %484 = sbr.rel (%p481) target = $region114
      $region113: #{tpu_custom_call.1} parent=5 // pred_region
        %s485 = ssub.s32 %s26, 1
        %s486 = sand.u32 %s39, 1
        %s487 = sand.u32 %s39, 1
        %s488 = smul.addr %s487, 16
        %s489 = scalar_lea.vmem [#allocation3], %s488
        // Predicated region
        $region115: #{tpu_custom_call.1} parent=113 // pred_check
          %p490 = pneg %p52
        $region116: #{tpu_custom_call.1} parent=113 // pred_check_branch
          %492 = sbr.rel (%p490) target = $region118
        $region117: #{tpu_custom_call.1} parent=113 // pred_region
          _
        $region118: #{tpu_custom_call.1} parent=113 // pred_fallthru
          _
        %s493 = sand.u32 %s39, 1
        %s494 = sand.u32 %s39, 1
        %s495 = smul.addr %s494, 16
        %s496 = scalar_lea.vmem [#allocation3], %s495
        %p497 = pneg %p52
        %p498 = pneg %p49
        %p499 = pneg %p73
        %p500 = pneg %p70
        %p501 = pneg %p94
        %p502 = pneg %p91
        %p503 = pneg %p115
        %p504 = pneg %p112
        %p505 = pneg %p136
        %p506 = pneg %p133
        %p507 = pneg %p157
        %p508 = pneg %p154
        %p509 = pneg %p178
        %p510 = pneg %p175
        %p511 = pneg %p199
        %p512 = pneg %p196
        %p513 = pneg %p220
        %p514 = pneg %p217
        %p515 = pneg %p241
        %p516 = pneg %p238
        %p517 = pneg %p262
        %p518 = pneg %p259
        %p519 = pneg %p283
        %p520 = pneg %p280
        %p521 = pneg %p304
        %p522 = pneg %p301
        %p523 = pneg %p325
        %p524 = pneg %p322
        %p525 = pneg %p346
        %p526 = pneg %p343
        %p527 = pneg %p372
        %p528 = pneg %p369
        %s529 = sand.u32 %s359, 1
        %s530 = scalar_lea.sflag [#allocation5], %s529
        %s531 = sand.u32 %s359, 1
        %s532 = scalar_lea.vmem [#allocation4], %s531
        %v533 = vld [vmem:[%s489] sm:$0xff]
        %v534 = vld [vmem:[%s489 + $0x8] sm:$0x1]
        %v535 = vld [vmem:[%s489 + $0x9] sm:$0x1]
        %v536 = vld [vmem:[%s1] sm:$0xf]
        %538 = vset.pattern.permute.xlu0 0
        %539 = vperm.xlu0 %538, %v536
        %v540 = vpop.permute.xlu0 %539
        %v542 = vlaneseq
        %v543 = vshrl.u32 %v542, 7
        %v544 = vsub.s32 0, %v543
        %v545 = vrot.slane %v534, %v544
        %v546 = vmul.f32 %v540, %v545
        %v547 = vld [vmem:[%s2] sm:$0xf]
        %549 = vset.pattern.permute.xlu0 0
        %550 = vperm.xlu0 %549, %v547
        %v551 = vpop.permute.xlu0 %550
        %v553 = vlaneseq
        %v554 = vshrl.u32 %v553, 7
        %v555 = vsub.s32 0, %v554
        %v556 = vrot.slane %v535, %v555
        %v557 = vmul.f32 %v551, %v556
        %v558 = vadd.f32 %v546, %v557
        %v559 = vand.u32 2147483647, %v558
        %vm560 = vcmp.le.f32.partialorder %v559, 0.7853982
        %vm561 = vcmp.lt.s32.totalorder %v558, 0
        %v562 = vand.u32 %v558, 2139095040
        %v563 = vshrl.u32 %v562, 23
        %v564 = vsub.s32 %v563, 127
        %v565 = vand.u32 2147483647, %v558
        %v566 = vand.u32 %v565, 8388607
        %v567 = vor.u32 %v566, 8388608
        %v568 = vsub.s32 0, %v567
        %v569 = vadd.s32 %v564, 1
        %vm570 = vcmp.gt.s32.totalorder %v569, 0
        %v571 = vsel %vm570, %v569, 0
        %v572 = vshrl.u32 %v571, 5
        %v573 = vand.u32 %v571, 31
        %v574 = vsub.s32 32, %v573
        %v575 = vshrl.u32 683565275, %v574
        %v576 = vshll.u32 683565275, %v573
        %v577 = vshrl.u32 2475754826, %v574
        %v578 = vor.u32 %v576, %v577
        %v579 = vshll.u32 2475754826, %v573
        %v580 = vshrl.u32 2131351028, %v574
        %v581 = vor.u32 %v579, %v580
        %v582 = vshll.u32 2131351028, %v573
        %v583 = vshrl.u32 2102212464, %v574
        %v584 = vor.u32 %v582, %v583
        %v585 = vshll.u32 2102212464, %v573
        %v586 = vshrl.u32 920167782, %v574
        %v587 = vor.u32 %v585, %v586
        %v588 = vshll.u32 920167782, %v573
        %v589 = vshrl.u32 1326507024, %v574
        %v590 = vor.u32 %v588, %v589
        %vm591 = vcmp.lt.s32.totalorder %v572, 1
        %vm592 = vcmp.lt.s32.totalorder %v572, 2
        %vm593 = vcmp.lt.s32.totalorder %v572, 3
        %vm594 = vcmp.lt.s32.totalorder %v572, 4
        %v595 = vsel %vm591, %v575, %v578
        %v596 = vsel %vm594, %v584, 2102212464
        %v597 = vsel %vm593, %v581, %v596
        %v598 = vsel %vm592, %v595, %v597
        %v599 = vsel %vm591, %v578, %v581
        %v600 = vsel %vm594, %v587, 920167782
        %v601 = vsel %vm593, %v584, %v600
        %v602 = vsel %vm592, %v599, %v601
        %v603 = vsel %vm591, %v581, %v584
        %v604 = vsel %vm594, %v590, 1326507024
        %v605 = vsel %vm593, %v587, %v604
        %v606 = vsel %vm592, %v603, %v605
        %v607 = vshll.u32 %v567, 8
        %v608 = vmul.u32.u64.compose %v607, %v606
        %v609 = vextract.low.u32 %v608
        %v610 = vextract.high.u32 %v608
        %v611 = vmul.u32.u64.compose %v607, %v602
        %v612 = vextract.low.u32 %v611
        %v613 = vextract.high.u32 %v611
        %v614 = vmul.u32 %v607, %v598
        %v615 = vadd.s32 %v610, %v612
        %vm616 = vc.u32 %v610, %v612
        %v617 = vadd.s32 %v613, 1
        %v618 = vsel %vm616, %v617, %v613
        %v619 = vadd.s32 %v614, %v618
        %v620 = vadd.s32 %v619, 536870912
        %v621 = vshrl.u32 %v620, 30
        %v622 = vshll.u32 %v621, 30
        %v623 = vsub.s32 %v619, %v622
        %vm624 = vcmp.lt.s32.totalorder %v623, 0
        %v625 = vsub.s32 0, %v623
        %v626 = vsel %vm624, %v625, %v623
        %v627 = vclz %v626
        %v628 = vsub.s32 %v627, 2
        %vm629 = vcmp.gt.s32.totalorder 0, %v628
        %v630 = vsel %vm629, 0, %v628
        %v631 = vsub.s32 32, %v630
        %v632 = vshll.u32 %v623, %v630
        %v633 = vshrl.u32 %v615, %v631
        %v634 = vor.u32 %v632, %v633
        %v635 = vsub.s32 4294967266, %v630
        %v636 = vadd.s32 %v635, 127
        %v637 = vshll.u32 %v636, 23
        %v638 = vor.u32 4788187, %v637
        %v639 = vand.u32 2147483647, %v638
        %v641 = vcvt.s32.f32 %v634
        %v642 = vmul.f32 %v641, %v639
        %v643 = vxor.u32 %v642, 2147483648
        %v644 = vsel %vm561, %v643, %v642
        %v645 = vsub.s32 4, %v621
        %v646 = vsel %vm561, %v645, %v621
        %v647 = vsel %vm560, %v558, %v644
        %v648 = vsel %vm560, 0, %v646
        %v649 = vcosq.f32.pop %v647
        %v650 = vsinq.f32.pop %v647
        %vm651 = vweird.f32 %v558
        %v652 = vand.u32 %v648, 3
        %vm653 = vcmp.lt.s32.totalorder %v652, 2
        %vm654 = vcmp.eq.s32.totalorder %v652, 0
        %v655 = vxor.u32 %v650, 2147483648
        %v656 = vsel %vm654, %v649, %v655
        %vm657 = vcmp.eq.s32.totalorder %v652, 2
        %v658 = vxor.u32 %v649, 2147483648
        %v659 = vsel %vm657, %v658, %v650
        %v660 = vsel %vm653, %v656, %v659
        %v661 = vsel %vm651, nan, %v660
        %v662 = vand.u32 2147483647, %v558
        %vm663 = vcmp.le.f32.partialorder %v662, 0.7853982
        %vm664 = vcmp.lt.s32.totalorder %v558, 0
        %v665 = vand.u32 %v558, 2139095040
        %v666 = vshrl.u32 %v665, 23
        %v667 = vsub.s32 %v666, 127
        %v668 = vand.u32 2147483647, %v558
        %v669 = vand.u32 %v668, 8388607
        %v670 = vor.u32 %v669, 8388608
        %v671 = vsub.s32 0, %v670
        %v672 = vadd.s32 %v667, 1
        %vm673 = vcmp.gt.s32.totalorder %v672, 0
        %v674 = vsel %vm673, %v672, 0
        %v675 = vshrl.u32 %v674, 5
        %v676 = vand.u32 %v674, 31
        %v677 = vsub.s32 32, %v676
        %v678 = vshrl.u32 683565275, %v677
        %v679 = vshll.u32 683565275, %v676
        %v680 = vshrl.u32 2475754826, %v677
        %v681 = vor.u32 %v679, %v680
        %v682 = vshll.u32 2475754826, %v676
        %v683 = vshrl.u32 2131351028, %v677
        %v684 = vor.u32 %v682, %v683
        %v685 = vshll.u32 2131351028, %v676
        %v686 = vshrl.u32 2102212464, %v677
        %v687 = vor.u32 %v685, %v686
        %v688 = vshll.u32 2102212464, %v676
        %v689 = vshrl.u32 920167782, %v677
        %v690 = vor.u32 %v688, %v689
        %v691 = vshll.u32 920167782, %v676
        %v692 = vshrl.u32 1326507024, %v677
        %v693 = vor.u32 %v691, %v692
        %vm694 = vcmp.lt.s32.totalorder %v675, 1
        %vm695 = vcmp.lt.s32.totalorder %v675, 2
        %vm696 = vcmp.lt.s32.totalorder %v675, 3
        %vm697 = vcmp.lt.s32.totalorder %v675, 4
        %v698 = vsel %vm694, %v678, %v681
        %v699 = vsel %vm697, %v687, 2102212464
        %v700 = vsel %vm696, %v684, %v699
        %v701 = vsel %vm695, %v698, %v700
        %v702 = vsel %vm694, %v681, %v684
        %v703 = vsel %vm697, %v690, 920167782
        %v704 = vsel %vm696, %v687, %v703
        %v705 = vsel %vm695, %v702, %v704
        %v706 = vsel %vm694, %v684, %v687
        %v707 = vsel %vm697, %v693, 1326507024
        %v708 = vsel %vm696, %v690, %v707
        %v709 = vsel %vm695, %v706, %v708
        %v710 = vshll.u32 %v670, 8
        %v711 = vmul.u32.u64.compose %v710, %v709
        %v712 = vextract.low.u32 %v711
        %v713 = vextract.high.u32 %v711
        %v714 = vmul.u32.u64.compose %v710, %v705
        %v715 = vextract.low.u32 %v714
        %v716 = vextract.high.u32 %v714
        %v717 = vmul.u32 %v710, %v701
        %v718 = vadd.s32 %v713, %v715
        %vm719 = vc.u32 %v713, %v715
        %v720 = vadd.s32 %v716, 1
        %v721 = vsel %vm719, %v720, %v716
        %v722 = vadd.s32 %v717, %v721
        %v723 = vadd.s32 %v722, 536870912
        %v724 = vshrl.u32 %v723, 30
        %v725 = vshll.u32 %v724, 30
        %v726 = vsub.s32 %v722, %v725
        %vm727 = vcmp.lt.s32.totalorder %v726, 0
        %v728 = vsub.s32 0, %v726
        %v729 = vsel %vm727, %v728, %v726
        %v730 = vclz %v729
        %v731 = vsub.s32 %v730, 2
        %vm732 = vcmp.gt.s32.totalorder 0, %v731
        %v733 = vsel %vm732, 0, %v731
        %v734 = vsub.s32 32, %v733
        %v735 = vshll.u32 %v726, %v733
        %v736 = vshrl.u32 %v718, %v734
        %v737 = vor.u32 %v735, %v736
        %v738 = vsub.s32 4294967266, %v733
        %v739 = vadd.s32 %v738, 127
        %v740 = vshll.u32 %v739, 23
        %v741 = vor.u32 4788187, %v740
        %v742 = vand.u32 2147483647, %v741
        %v744 = vcvt.s32.f32 %v737
        %v745 = vmul.f32 %v744, %v742
        %v746 = vxor.u32 %v745, 2147483648
        %v747 = vsel %vm664, %v746, %v745
        %v748 = vsub.s32 4, %v724
        %v749 = vsel %vm664, %v748, %v724
        %v750 = vsel %vm663, %v558, %v747
        %v751 = vsel %vm663, 0, %v749
        %v752 = vcosq.f32.pop %v750
        %v753 = vsinq.f32.pop %v750
        %vm754 = vweird.f32 %v558
        %v755 = vadd.s32 %v751, 3
        %v756 = vand.u32 %v755, 3
        %vm757 = vcmp.lt.s32.totalorder %v756, 2
        %vm758 = vcmp.eq.s32.totalorder %v756, 0
        %v759 = vxor.u32 %v753, 2147483648
        %v760 = vsel %vm758, %v752, %v759
        %vm761 = vcmp.eq.s32.totalorder %v756, 2
        %v762 = vxor.u32 %v752, 2147483648
        %v763 = vsel %vm761, %v762, %v753
        %v764 = vsel %vm757, %v760, %v763
        %v765 = vsel %vm754, nan, %v764
        %v766 = vld [vmem:[%s3] sm:$0xff]
        %v767 = vld [vmem:[%s3 + $0x8] sm:$0xff]
        %v768 = vld [vmem:[%s4] sm:$0xff]
        %v769 = vld [vmem:[%s4 + $0x8] sm:$0xff]
        %vm770 = vcmask 31744
        %v772 = vsel %vm770, %v768, 0
        %v775 = vsel %vm770, %v769, 0
        %vm777 = vcmask 1043456
        %v779 = vsel %vm777, %v661, 0
        %781 = vmatprep.subr.mxu0 0.0
        %782 = vmatpush1.msra.mxu0 0.0
        %783 = vmatprep.subr.mxu0 0.0
        %784 = vmatpush1.msra.mxu0 0.0
        %785 = vmatprep.subr.mxu0 0.0
        %786 = vmatpush1.msra.mxu0 0.0
        %787 = vmatprep.subr.mxu0 0.0
        %788 = vmatpush1.msra.mxu0 0.0
        %789 = vmatprep.subr.mxu0 0.0
        %790 = vmatpush1.msra.mxu0 0.0
        %791 = vmatprep.subr.mxu0 0.0
        %792 = vmatpush1.msra.mxu0 0.0
        %793 = vmatprep.subr.mxu0 0.0
        %794 = vmatpush1.msra.mxu0 0.0
        %795 = vmatprep.subr.mxu0 0.0
        %796 = vmatpush1.msra.mxu0 0.0
        %797 = vmatprep.subr.mxu0 0.0
        %798 = vmatpush1.msra.mxu0 0.0
        %799 = vmatprep.subr.mxu0 0.0
        %800 = vmatpush1.msra.mxu0 0.0
        %801 = vmatprep.subr.mxu0 0.0
        %802 = vmatpush1.msra.mxu0 0.0
        %803 = vmatprep.subr.mxu0 0.0
        %804 = vmatpush1.msra.mxu0 0.0
        %805 = vmatprep.subr.mxu0 0.0
        %806 = vmatpush1.msra.mxu0 0.0
        %807 = vmatprep.subr.mxu0 0.0
        %808 = vmatpush1.msra.mxu0 0.0
        %809 = vmatprep.subr.mxu0 0.0
        %810 = vmatpush1.msra.mxu0 0.0
        %811 = vmatprep.subr.mxu0 0.0
        %812 = vmatpush1.msra.mxu0 %v779
        %813 = vmatprep.subr.mxu0 0.0
        %814 = vmatpush2.msra.mxu0 0.0
        %815 = vmatprep.subr.mxu0 0.0
        %816 = vmatpush2.msra.mxu0 0.0
        %817 = vmatprep.subr.mxu0 0.0
        %818 = vmatpush2.msra.mxu0 0.0
        %819 = vmatprep.subr.mxu0 0.0
        %820 = vmatpush2.msra.mxu0 0.0
        %821 = vmatprep.subr.mxu0 0.0
        %822 = vmatpush2.msra.mxu0 0.0
        %823 = vmatprep.subr.mxu0 0.0
        %824 = vmatpush2.msra.mxu0 0.0
        %825 = vmatprep.subr.mxu0 0.0
        %826 = vmatpush2.msra.mxu0 0.0
        %827 = vmatprep.subr.mxu0 0.0
        %828 = vmatpush2.msra.mxu0 0.0
        %829 = vmatprep.subr.mxu0 0.0
        %830 = vmatpush2.msra.mxu0 0.0
        %831 = vmatprep.subr.mxu0 0.0
        %832 = vmatpush2.msra.mxu0 0.0
        %833 = vmatprep.subr.mxu0 0.0
        %834 = vmatpush2.msra.mxu0 0.0
        %835 = vmatprep.subr.mxu0 0.0
        %836 = vmatpush2.msra.mxu0 0.0
        %837 = vmatprep.subr.mxu0 0.0
        %838 = vmatpush2.msra.mxu0 0.0
        %839 = vmatprep.subr.mxu0 0.0
        %840 = vmatpush2.msra.mxu0 0.0
        %841 = vmatprep.subr.mxu0 0.0
        %842 = vmatpush2.msra.mxu0 0.0
        %843 = vmatprep.subr.mxu0 0.0
        %844 = vmatpush2.msra.mxu0 0.0
        %845 = vmatprep.mubr.f32.mxu0 0.0
        %846 = vmatmul.mubr.f32.gmra.mxu0 %v772
        %v847 = vpop.f32.mrf.mxu0
        %v848 = vadd.f32 0.0, %v847
        %v849 = vpop.f32.mrf.mxu0
        %850 = vmatprep.mubr.f32.mxu0 0.0
        %851 = vmatmul.mubr.f32.gmra.mxu0 %v775
        %v852 = vpop.f32.mrf.mxu0
        %v853 = vadd.f32 0.0, %v852
        %v854 = vpop.f32.mrf.mxu0
        %855 = vdwg.mxu0
        %vm856 = vcmask 64512
        %v858 = vsel %vm856, %v766, 0
        %v861 = vsel %vm856, %v767, 0
        %863 = vmatprep.subr.mxu0 0.0
        %864 = vmatpush1.msra.mxu0 0.0
        %865 = vmatprep.subr.mxu0 0.0
        %866 = vmatpush1.msra.mxu0 0.0
        %867 = vmatprep.subr.mxu0 0.0
        %868 = vmatpush1.msra.mxu0 0.0
        %869 = vmatprep.subr.mxu0 0.0
        %870 = vmatpush1.msra.mxu0 0.0
        %871 = vmatprep.subr.mxu0 0.0
        %872 = vmatpush1.msra.mxu0 0.0
        %873 = vmatprep.subr.mxu0 0.0
        %874 = vmatpush1.msra.mxu0 0.0
        %875 = vmatprep.subr.mxu0 0.0
        %876 = vmatpush1.msra.mxu0 0.0
        %877 = vmatprep.subr.mxu0 0.0
        %878 = vmatpush1.msra.mxu0 0.0
        %879 = vmatprep.subr.mxu0 0.0
        %880 = vmatpush1.msra.mxu0 0.0
        %881 = vmatprep.subr.mxu0 0.0
        %882 = vmatpush1.msra.mxu0 0.0
        %883 = vmatprep.subr.mxu0 0.0
        %884 = vmatpush1.msra.mxu0 0.0
        %885 = vmatprep.subr.mxu0 0.0
        %886 = vmatpush1.msra.mxu0 0.0
        %887 = vmatprep.subr.mxu0 0.0
        %888 = vmatpush1.msra.mxu0 0.0
        %889 = vmatprep.subr.mxu0 0.0
        %890 = vmatpush1.msra.mxu0 0.0
        %891 = vmatprep.subr.mxu0 0.0
        %892 = vmatpush1.msra.mxu0 0.0
        %893 = vmatprep.subr.mxu0 0.0
        %894 = vmatpush1.msra.mxu0 %v533
        %895 = vmatprep.subr.mxu0 0.0
        %896 = vmatpush2.msra.mxu0 0.0
        %897 = vmatprep.subr.mxu0 0.0
        %898 = vmatpush2.msra.mxu0 0.0
        %899 = vmatprep.subr.mxu0 0.0
        %900 = vmatpush2.msra.mxu0 0.0
        %901 = vmatprep.subr.mxu0 0.0
        %902 = vmatpush2.msra.mxu0 0.0
        %903 = vmatprep.subr.mxu0 0.0
        %904 = vmatpush2.msra.mxu0 0.0
        %905 = vmatprep.subr.mxu0 0.0
        %906 = vmatpush2.msra.mxu0 0.0
        %907 = vmatprep.subr.mxu0 0.0
        %908 = vmatpush2.msra.mxu0 0.0
        %909 = vmatprep.subr.mxu0 0.0
        %910 = vmatpush2.msra.mxu0 0.0
        %911 = vmatprep.subr.mxu0 0.0
        %912 = vmatpush2.msra.mxu0 0.0
        %913 = vmatprep.subr.mxu0 0.0
        %914 = vmatpush2.msra.mxu0 0.0
        %915 = vmatprep.subr.mxu0 0.0
        %916 = vmatpush2.msra.mxu0 0.0
        %917 = vmatprep.subr.mxu0 0.0
        %918 = vmatpush2.msra.mxu0 0.0
        %919 = vmatprep.subr.mxu0 0.0
        %920 = vmatpush2.msra.mxu0 0.0
        %921 = vmatprep.subr.mxu0 0.0
        %922 = vmatpush2.msra.mxu0 0.0
        %923 = vmatprep.subr.mxu0 0.0
        %924 = vmatpush2.msra.mxu0 0.0
        %925 = vmatprep.subr.mxu0 0.0
        %926 = vmatpush2.msra.mxu0 0.0
        %927 = vmatprep.mubr.f32.mxu0 0.0
        %928 = vmatmul.mubr.f32.gmra.mxu0 %v858
        %v929 = vpop.f32.mrf.mxu0
        %v930 = vadd.f32 %v848, %v929
        %v931 = vpop.f32.mrf.mxu0
        %932 = vmatprep.mubr.f32.mxu0 0.0
        %933 = vmatmul.mubr.f32.gmra.mxu0 %v861
        %v934 = vpop.f32.mrf.mxu0
        %v935 = vadd.f32 %v853, %v934
        %v936 = vpop.f32.mrf.mxu0
        %937 = vdwg.mxu0
        %v938 = vld [vmem:[%s5] sm:$0xff]
        %v939 = vld [vmem:[%s5 + $0x8] sm:$0xff]
        %v941 = vsel %vm770, %v938, 0
        %v944 = vsel %vm770, %v939, 0
        %v947 = vsel %vm777, %v765, 0
        %949 = vmatprep.subr.mxu0 0.0
        %950 = vmatpush1.msra.mxu0 0.0
        %951 = vmatprep.subr.mxu0 0.0
        %952 = vmatpush1.msra.mxu0 0.0
        %953 = vmatprep.subr.mxu0 0.0
        %954 = vmatpush1.msra.mxu0 0.0
        %955 = vmatprep.subr.mxu0 0.0
        %956 = vmatpush1.msra.mxu0 0.0
        %957 = vmatprep.subr.mxu0 0.0
        %958 = vmatpush1.msra.mxu0 0.0
        %959 = vmatprep.subr.mxu0 0.0
        %960 = vmatpush1.msra.mxu0 0.0
        %961 = vmatprep.subr.mxu0 0.0
        %962 = vmatpush1.msra.mxu0 0.0
        %963 = vmatprep.subr.mxu0 0.0
        %964 = vmatpush1.msra.mxu0 0.0
        %965 = vmatprep.subr.mxu0 0.0
        %966 = vmatpush1.msra.mxu0 0.0
        %967 = vmatprep.subr.mxu0 0.0
        %968 = vmatpush1.msra.mxu0 0.0
        %969 = vmatprep.subr.mxu0 0.0
        %970 = vmatpush1.msra.mxu0 0.0
        %971 = vmatprep.subr.mxu0 0.0
        %972 = vmatpush1.msra.mxu0 0.0
        %973 = vmatprep.subr.mxu0 0.0
        %974 = vmatpush1.msra.mxu0 0.0
        %975 = vmatprep.subr.mxu0 0.0
        %976 = vmatpush1.msra.mxu0 0.0
        %977 = vmatprep.subr.mxu0 0.0
        %978 = vmatpush1.msra.mxu0 0.0
        %979 = vmatprep.subr.mxu0 0.0
        %980 = vmatpush1.msra.mxu0 %v947
        %981 = vmatprep.subr.mxu0 0.0
        %982 = vmatpush2.msra.mxu0 0.0
        %983 = vmatprep.subr.mxu0 0.0
        %984 = vmatpush2.msra.mxu0 0.0
        %985 = vmatprep.subr.mxu0 0.0
        %986 = vmatpush2.msra.mxu0 0.0
        %987 = vmatprep.subr.mxu0 0.0
        %988 = vmatpush2.msra.mxu0 0.0
        %989 = vmatprep.subr.mxu0 0.0
        %990 = vmatpush2.msra.mxu0 0.0
        %991 = vmatprep.subr.mxu0 0.0
        %992 = vmatpush2.msra.mxu0 0.0
        %993 = vmatprep.subr.mxu0 0.0
        %994 = vmatpush2.msra.mxu0 0.0
        %995 = vmatprep.subr.mxu0 0.0
        %996 = vmatpush2.msra.mxu0 0.0
        %997 = vmatprep.subr.mxu0 0.0
        %998 = vmatpush2.msra.mxu0 0.0
        %999 = vmatprep.subr.mxu0 0.0
        %1000 = vmatpush2.msra.mxu0 0.0
        %1001 = vmatprep.subr.mxu0 0.0
        %1002 = vmatpush2.msra.mxu0 0.0
        %1003 = vmatprep.subr.mxu0 0.0
        %1004 = vmatpush2.msra.mxu0 0.0
        %1005 = vmatprep.subr.mxu0 0.0
        %1006 = vmatpush2.msra.mxu0 0.0
        %1007 = vmatprep.subr.mxu0 0.0
        %1008 = vmatpush2.msra.mxu0 0.0
        %1009 = vmatprep.subr.mxu0 0.0
        %1010 = vmatpush2.msra.mxu0 0.0
        %1011 = vmatprep.subr.mxu0 0.0
        %1012 = vmatpush2.msra.mxu0 0.0
        %1013 = vmatprep.mubr.f32.mxu0 0.0
        %1014 = vmatmul.mubr.f32.gmra.mxu0 %v941
        %v1015 = vpop.f32.mrf.mxu0
        %v1016 = vadd.f32 0.0, %v1015
        %v1017 = vpop.f32.mrf.mxu0
        %1018 = vmatprep.mubr.f32.mxu0 0.0
        %1019 = vmatmul.mubr.f32.gmra.mxu0 %v944
        %v1020 = vpop.f32.mrf.mxu0
        %v1021 = vadd.f32 0.0, %v1020
        %v1022 = vpop.f32.mrf.mxu0
        %1023 = vdwg.mxu0
        %v1024 = vadd.f32 %v930, %v1016
        %v1025 = vadd.f32 %v935, %v1021
        %v1026 = vld [vmem:[%s6] sm:$0xff]
        %v1027 = vld [vmem:[%s6 + $0x8] sm:$0xff]
        %1029 = vset.pattern.permute.xlu0 0
        %1030 = vperm.xlu0 %1029, %v1026
        %v1031 = vpop.permute.xlu0 %1030
        %1034 = vset.pattern.permute.xlu0 0
        %1035 = vperm.xlu0 %1034, %v1027
        %v1036 = vpop.permute.xlu0 %1035
        %v1038 = vadd.f32 %v1024, %v1031
        %v1039 = vadd.f32 %v1025, %v1036
        %vm1040 = vcmp.gt.f32.partialorder %v1038, 0.0
        %vm1041 = vcmp.gt.f32.partialorder %v1039, 0.0
        %v1042 = vmul.f32 %v1038, 1.442695
        %v1043 = vpow.pop %v1042
        %v1044 = vmul.f32 %v1039, 1.442695
        %v1045 = vpow.pop %v1044
        %v1046 = vsub.f32 %v1043, 1.0
        %v1047 = vsub.f32 %v1045, 1.0
        %v1048 = vsel %vm1040, %v1038, %v1046
        %v1049 = vsel %vm1041, %v1039, %v1047
        %v1050 = vld [vmem:[%s7] sm:$0xff]
        %v1051 = vld [vmem:[%s7 + $0x8] sm:$0xff]
        %v1052 = vld [vmem:[%s8] sm:$0xff]
        %v1053 = vld [vmem:[%s8 + $0x8] sm:$0xff]
        %1055 = vset.pattern.permute.xlu0 0
        %1056 = vperm.xlu0 %1055, %v1052
        %v1057 = vpop.permute.xlu0 %1056
        %1060 = vset.pattern.permute.xlu0 0
        %1061 = vperm.xlu0 %1060, %v1053
        %v1062 = vpop.permute.xlu0 %1061
        %vm1064 = vcmask 130048
        %v1066 = vsel %vm1064, %v1050, 0
        %v1069 = vsel %vm1064, %v1051, 0
        %1071 = vmatprep.subr.mxu0 0.0
        %1072 = vmatpush1.msra.mxu0 0.0
        %1073 = vmatprep.subr.mxu0 0.0
        %1074 = vmatpush1.msra.mxu0 0.0
        %1075 = vmatprep.subr.mxu0 0.0
        %1076 = vmatpush1.msra.mxu0 0.0
        %1077 = vmatprep.subr.mxu0 0.0
        %1078 = vmatpush1.msra.mxu0 0.0
        %1079 = vmatprep.subr.mxu0 0.0
        %1080 = vmatpush1.msra.mxu0 0.0
        %1081 = vmatprep.subr.mxu0 0.0
        %1082 = vmatpush1.msra.mxu0 0.0
        %1083 = vmatprep.subr.mxu0 0.0
        %1084 = vmatpush1.msra.mxu0 0.0
        %1085 = vmatprep.subr.mxu0 0.0
        %1086 = vmatpush1.msra.mxu0 0.0
        %1087 = vmatprep.subr.mxu0 0.0
        %1088 = vmatpush1.msra.mxu0 0.0
        %1089 = vmatprep.subr.mxu0 0.0
        %1090 = vmatpush1.msra.mxu0 0.0
        %1091 = vmatprep.subr.mxu0 0.0
        %1092 = vmatpush1.msra.mxu0 0.0
        %1093 = vmatprep.subr.mxu0 0.0
        %1094 = vmatpush1.msra.mxu0 0.0
        %1095 = vmatprep.subr.mxu0 0.0
        %1096 = vmatpush1.msra.mxu0 0.0
        %1097 = vmatprep.subr.mxu0 0.0
        %1098 = vmatpush1.msra.mxu0 0.0
        %1099 = vmatprep.subr.mxu0 0.0
        %1100 = vmatpush1.msra.mxu0 %v1049
        %1101 = vmatprep.subr.mxu0 0.0
        %1102 = vmatpush1.msra.mxu0 %v1048
        %1103 = vmatprep.subr.mxu0 0.0
        %1104 = vmatpush2.msra.mxu0 0.0
        %1105 = vmatprep.subr.mxu0 0.0
        %1106 = vmatpush2.msra.mxu0 0.0
        %1107 = vmatprep.subr.mxu0 0.0
        %1108 = vmatpush2.msra.mxu0 0.0
        %1109 = vmatprep.subr.mxu0 0.0
        %1110 = vmatpush2.msra.mxu0 0.0
        %1111 = vmatprep.subr.mxu0 0.0
        %1112 = vmatpush2.msra.mxu0 0.0
        %1113 = vmatprep.subr.mxu0 0.0
        %1114 = vmatpush2.msra.mxu0 0.0
        %1115 = vmatprep.subr.mxu0 0.0
        %1116 = vmatpush2.msra.mxu0 0.0
        %1117 = vmatprep.subr.mxu0 0.0
        %1118 = vmatpush2.msra.mxu0 0.0
        %1119 = vmatprep.subr.mxu0 0.0
        %1120 = vmatpush2.msra.mxu0 0.0
        %1121 = vmatprep.subr.mxu0 0.0
        %1122 = vmatpush2.msra.mxu0 0.0
        %1123 = vmatprep.subr.mxu0 0.0
        %1124 = vmatpush2.msra.mxu0 0.0
        %1125 = vmatprep.subr.mxu0 0.0
        %1126 = vmatpush2.msra.mxu0 0.0
        %1127 = vmatprep.subr.mxu0 0.0
        %1128 = vmatpush2.msra.mxu0 0.0
        %1129 = vmatprep.subr.mxu0 0.0
        %1130 = vmatpush2.msra.mxu0 0.0
        %1131 = vmatprep.subr.mxu0 0.0
        %1132 = vmatpush2.msra.mxu0 0.0
        %1133 = vmatprep.subr.mxu0 0.0
        %1134 = vmatpush2.msra.mxu0 0.0
        %1135 = vmatprep.mubr.f32.mxu0 0.0
        %1136 = vmatmul.mubr.f32.gmra.mxu0 %v1066
        %v1137 = vpop.f32.mrf.mxu0
        %v1138 = vadd.f32 %v1057, %v1137
        %v1139 = vpop.f32.mrf.mxu0
        %1140 = vmatprep.mubr.f32.mxu0 0.0
        %1141 = vmatmul.mubr.f32.gmra.mxu0 %v1069
        %v1142 = vpop.f32.mrf.mxu0
        %v1143 = vadd.f32 %v1062, %v1142
        %v1144 = vpop.f32.mrf.mxu0
        %1145 = vdwg.mxu0
        %vm1146 = vcmp.gt.f32.partialorder %v1138, 0.0
        %vm1147 = vcmp.gt.f32.partialorder %v1143, 0.0
        %v1148 = vmul.f32 %v1138, 1.442695
        %v1149 = vpow.pop %v1148
        %v1150 = vmul.f32 %v1143, 1.442695
        %v1151 = vpow.pop %v1150
        %v1152 = vsub.f32 %v1149, 1.0
        %v1153 = vsub.f32 %v1151, 1.0
        %v1154 = vsel %vm1146, %v1138, %v1152
        %v1155 = vsel %vm1147, %v1143, %v1153
        %v1156 = vld [vmem:[%s9] sm:$0xff]
        %v1157 = vld [vmem:[%s9 + $0x8] sm:$0xff]
        %v1158 = vld [vmem:[%s10] sm:$0xff]
        %v1159 = vld [vmem:[%s10 + $0x8] sm:$0xff]
        %1161 = vset.pattern.permute.xlu0 0
        %1162 = vperm.xlu0 %1161, %v1158
        %v1163 = vpop.permute.xlu0 %1162
        %1166 = vset.pattern.permute.xlu0 0
        %1167 = vperm.xlu0 %1166, %v1159
        %v1168 = vpop.permute.xlu0 %1167
        %v1171 = vsel %vm1064, %v1156, 0
        %v1174 = vsel %vm1064, %v1157, 0
        %1176 = vmatprep.subr.mxu0 0.0
        %1177 = vmatpush1.msra.mxu0 0.0
        %1178 = vmatprep.subr.mxu0 0.0
        %1179 = vmatpush1.msra.mxu0 0.0
        %1180 = vmatprep.subr.mxu0 0.0
        %1181 = vmatpush1.msra.mxu0 0.0
        %1182 = vmatprep.subr.mxu0 0.0
        %1183 = vmatpush1.msra.mxu0 0.0
        %1184 = vmatprep.subr.mxu0 0.0
        %1185 = vmatpush1.msra.mxu0 0.0
        %1186 = vmatprep.subr.mxu0 0.0
        %1187 = vmatpush1.msra.mxu0 0.0
        %1188 = vmatprep.subr.mxu0 0.0
        %1189 = vmatpush1.msra.mxu0 0.0
        %1190 = vmatprep.subr.mxu0 0.0
        %1191 = vmatpush1.msra.mxu0 0.0
        %1192 = vmatprep.subr.mxu0 0.0
        %1193 = vmatpush1.msra.mxu0 0.0
        %1194 = vmatprep.subr.mxu0 0.0
        %1195 = vmatpush1.msra.mxu0 0.0
        %1196 = vmatprep.subr.mxu0 0.0
        %1197 = vmatpush1.msra.mxu0 0.0
        %1198 = vmatprep.subr.mxu0 0.0
        %1199 = vmatpush1.msra.mxu0 0.0
        %1200 = vmatprep.subr.mxu0 0.0
        %1201 = vmatpush1.msra.mxu0 0.0
        %1202 = vmatprep.subr.mxu0 0.0
        %1203 = vmatpush1.msra.mxu0 0.0
        %1204 = vmatprep.subr.mxu0 0.0
        %1205 = vmatpush1.msra.mxu0 %v1155
        %1206 = vmatprep.subr.mxu0 0.0
        %1207 = vmatpush1.msra.mxu0 %v1154
        %1208 = vmatprep.subr.mxu0 0.0
        %1209 = vmatpush2.msra.mxu0 0.0
        %1210 = vmatprep.subr.mxu0 0.0
        %1211 = vmatpush2.msra.mxu0 0.0
        %1212 = vmatprep.subr.mxu0 0.0
        %1213 = vmatpush2.msra.mxu0 0.0
        %1214 = vmatprep.subr.mxu0 0.0
        %1215 = vmatpush2.msra.mxu0 0.0
        %1216 = vmatprep.subr.mxu0 0.0
        %1217 = vmatpush2.msra.mxu0 0.0
        %1218 = vmatprep.subr.mxu0 0.0
        %1219 = vmatpush2.msra.mxu0 0.0
        %1220 = vmatprep.subr.mxu0 0.0
        %1221 = vmatpush2.msra.mxu0 0.0
        %1222 = vmatprep.subr.mxu0 0.0
        %1223 = vmatpush2.msra.mxu0 0.0
        %1224 = vmatprep.subr.mxu0 0.0
        %1225 = vmatpush2.msra.mxu0 0.0
        %1226 = vmatprep.subr.mxu0 0.0
        %1227 = vmatpush2.msra.mxu0 0.0
        %1228 = vmatprep.subr.mxu0 0.0
        %1229 = vmatpush2.msra.mxu0 0.0
        %1230 = vmatprep.subr.mxu0 0.0
        %1231 = vmatpush2.msra.mxu0 0.0
        %1232 = vmatprep.subr.mxu0 0.0
        %1233 = vmatpush2.msra.mxu0 0.0
        %1234 = vmatprep.subr.mxu0 0.0
        %1235 = vmatpush2.msra.mxu0 0.0
        %1236 = vmatprep.subr.mxu0 0.0
        %1237 = vmatpush2.msra.mxu0 0.0
        %1238 = vmatprep.subr.mxu0 0.0
        %1239 = vmatpush2.msra.mxu0 0.0
        %1240 = vmatprep.mubr.f32.mxu0 0.0
        %1241 = vmatmul.mubr.f32.gmra.mxu0 %v1171
        %v1242 = vpop.f32.mrf.mxu0
        %v1243 = vadd.f32 %v1163, %v1242
        %v1244 = vpop.f32.mrf.mxu0
        %1245 = vmatprep.mubr.f32.mxu0 0.0
        %1246 = vmatmul.mubr.f32.gmra.mxu0 %v1174
        %v1247 = vpop.f32.mrf.mxu0
        %v1248 = vadd.f32 %v1168, %v1247
        %v1249 = vpop.f32.mrf.mxu0
        %1250 = vdwg.mxu0
        %vm1251 = vcmp.gt.f32.partialorder %v1243, 0.0
        %vm1252 = vcmp.gt.f32.partialorder %v1248, 0.0
        %v1253 = vmul.f32 %v1243, 1.442695
        %v1254 = vpow.pop %v1253
        %v1255 = vmul.f32 %v1248, 1.442695
        %v1256 = vpow.pop %v1255
        %v1257 = vsub.f32 %v1254, 1.0
        %v1258 = vsub.f32 %v1256, 1.0
        %v1259 = vsel %vm1251, %v1243, %v1257
        %v1260 = vsel %vm1252, %v1248, %v1258
        %v1261 = vld [vmem:[%s11] sm:$0xff]
        %v1262 = vld [vmem:[%s11 + $0x8] sm:$0xff]
        %v1263 = vld [vmem:[%s12] sm:$0xff]
        %v1264 = vld [vmem:[%s12 + $0x8] sm:$0xff]
        %1266 = vset.pattern.permute.xlu0 0
        %1267 = vperm.xlu0 %1266, %v1263
        %v1268 = vpop.permute.xlu0 %1267
        %1271 = vset.pattern.permute.xlu0 0
        %1272 = vperm.xlu0 %1271, %v1264
        %v1273 = vpop.permute.xlu0 %1272
        %v1276 = vsel %vm1064, %v1261, 0
        %v1279 = vsel %vm1064, %v1262, 0
        %1281 = vmatprep.subr.mxu0 0.0
        %1282 = vmatpush1.msra.mxu0 0.0
        %1283 = vmatprep.subr.mxu0 0.0
        %1284 = vmatpush1.msra.mxu0 0.0
        %1285 = vmatprep.subr.mxu0 0.0
        %1286 = vmatpush1.msra.mxu0 0.0
        %1287 = vmatprep.subr.mxu0 0.0
        %1288 = vmatpush1.msra.mxu0 0.0
        %1289 = vmatprep.subr.mxu0 0.0
        %1290 = vmatpush1.msra.mxu0 0.0
        %1291 = vmatprep.subr.mxu0 0.0
        %1292 = vmatpush1.msra.mxu0 0.0
        %1293 = vmatprep.subr.mxu0 0.0
        %1294 = vmatpush1.msra.mxu0 0.0
        %1295 = vmatprep.subr.mxu0 0.0
        %1296 = vmatpush1.msra.mxu0 0.0
        %1297 = vmatprep.subr.mxu0 0.0
        %1298 = vmatpush1.msra.mxu0 0.0
        %1299 = vmatprep.subr.mxu0 0.0
        %1300 = vmatpush1.msra.mxu0 0.0
        %1301 = vmatprep.subr.mxu0 0.0
        %1302 = vmatpush1.msra.mxu0 0.0
        %1303 = vmatprep.subr.mxu0 0.0
        %1304 = vmatpush1.msra.mxu0 0.0
        %1305 = vmatprep.subr.mxu0 0.0
        %1306 = vmatpush1.msra.mxu0 0.0
        %1307 = vmatprep.subr.mxu0 0.0
        %1308 = vmatpush1.msra.mxu0 0.0
        %1309 = vmatprep.subr.mxu0 0.0
        %1310 = vmatpush1.msra.mxu0 %v1260
        %1311 = vmatprep.subr.mxu0 0.0
        %1312 = vmatpush1.msra.mxu0 %v1259
        %1313 = vmatprep.subr.mxu0 0.0
        %1314 = vmatpush2.msra.mxu0 0.0
        %1315 = vmatprep.subr.mxu0 0.0
        %1316 = vmatpush2.msra.mxu0 0.0
        %1317 = vmatprep.subr.mxu0 0.0
        %1318 = vmatpush2.msra.mxu0 0.0
        %1319 = vmatprep.subr.mxu0 0.0
        %1320 = vmatpush2.msra.mxu0 0.0
        %1321 = vmatprep.subr.mxu0 0.0
        %1322 = vmatpush2.msra.mxu0 0.0
        %1323 = vmatprep.subr.mxu0 0.0
        %1324 = vmatpush2.msra.mxu0 0.0
        %1325 = vmatprep.subr.mxu0 0.0
        %1326 = vmatpush2.msra.mxu0 0.0
        %1327 = vmatprep.subr.mxu0 0.0
        %1328 = vmatpush2.msra.mxu0 0.0
        %1329 = vmatprep.subr.mxu0 0.0
        %1330 = vmatpush2.msra.mxu0 0.0
        %1331 = vmatprep.subr.mxu0 0.0
        %1332 = vmatpush2.msra.mxu0 0.0
        %1333 = vmatprep.subr.mxu0 0.0
        %1334 = vmatpush2.msra.mxu0 0.0
        %1335 = vmatprep.subr.mxu0 0.0
        %1336 = vmatpush2.msra.mxu0 0.0
        %1337 = vmatprep.subr.mxu0 0.0
        %1338 = vmatpush2.msra.mxu0 0.0
        %1339 = vmatprep.subr.mxu0 0.0
        %1340 = vmatpush2.msra.mxu0 0.0
        %1341 = vmatprep.subr.mxu0 0.0
        %1342 = vmatpush2.msra.mxu0 0.0
        %1343 = vmatprep.subr.mxu0 0.0
        %1344 = vmatpush2.msra.mxu0 0.0
        %1345 = vmatprep.mubr.f32.mxu0 0.0
        %1346 = vmatmul.mubr.f32.gmra.mxu0 %v1276
        %v1347 = vpop.f32.mrf.mxu0
        %v1348 = vadd.f32 %v1268, %v1347
        %v1349 = vpop.f32.mrf.mxu0
        %1350 = vmatprep.mubr.f32.mxu0 0.0
        %1351 = vmatmul.mubr.f32.gmra.mxu0 %v1279
        %v1352 = vpop.f32.mrf.mxu0
        %v1353 = vadd.f32 %v1273, %v1352
        %v1354 = vpop.f32.mrf.mxu0
        %1355 = vdwg.mxu0
        %vm1356 = vcmp.gt.f32.partialorder %v1348, 0.0
        %vm1357 = vcmp.gt.f32.partialorder %v1353, 0.0
        %v1358 = vmul.f32 %v1348, 1.442695
        %v1359 = vpow.pop %v1358
        %v1360 = vmul.f32 %v1353, 1.442695
        %v1361 = vpow.pop %v1360
        %v1362 = vsub.f32 %v1359, 1.0
        %v1363 = vsub.f32 %v1361, 1.0
        %v1364 = vsel %vm1356, %v1348, %v1362
        %v1365 = vsel %vm1357, %v1353, %v1363
        %v1366 = vld [vmem:[%s13] sm:$0xff]
        %v1367 = vld [vmem:[%s13 + $0x8] sm:$0xff]
        %1369 = vset.pattern.permute.xlu0 0
        %1370 = vperm.xlu0 %1369, %v1366
        %v1371 = vpop.permute.xlu0 %1370
        %1374 = vset.pattern.permute.xlu0 0
        %1375 = vperm.xlu0 %1374, %v1367
        %v1376 = vpop.permute.xlu0 %1375
        %v1378 = vmul.f32 %v1371, %v1364
        %v1379 = vmul.f32 %v1376, %v1365
        %v1380 = vadd.f32 %v1378, %v1379
        %v1381 = vrot.slane %v1380, 4
        %v1382 = vadd.f32 %v1380, %v1381
        %v1383 = vrot.slane %v1382, 2
        %v1384 = vadd.f32 %v1382, %v1383
        %v1385 = vrot.slane %v1384, 1
        %v1386 = vadd.f32 %v1384, %v1385
        %v1387 = vld [vmem:[#allocation2] sm:$0x1]
        %1389 = vset.pattern.permute.xlu0 0
        %1390 = vperm.xlu0 %1389, %v1387
        %v1391 = vpop.permute.xlu0 %1390
        %v1393 = vlaneseq
        %v1394 = vshrl.u32 %v1393, 7
        %v1395 = vsub.s32 0, %v1394
        %v1396 = vrot.slane %v1391, %v1395
        %v1397 = vadd.f32 %v1386, %v1396
        %1398 = vst [vmem:[%s532] sm:$0x1] %v1397
        %s1399 = sand.u32 %s359, 1
        %s1400 = scalar_lea.sflag [#allocation5], %s1399
        %s1401 = sand.u32 %s359, 1
        %s1402 = scalar_lea.vmem [#allocation4], %s1401
        // Predicated region
        $region119: #{tpu_custom_call.1} parent=113 // pred_check
          %p1403 = pneg %p369
        $region120: #{tpu_custom_call.1} parent=113 // pred_check_branch
          %1405 = sbr.rel (%p1403) target = $region122
        $region121: #{tpu_custom_call.1} parent=113 // pred_region
          %s1407 = ssub.s32 16, 16
          %1408 = vsyncadd %s1400, %s1407
          %s1409 = smul.addr %s31, 16
          %s1410 = scalar_lea.hbm %s15, %s1409
          %s1412 = sshll.u32 %s1402, 4
          %s1413 = int_to_ptr.vmem [resolvable:$true] %s1412
          %1415 = dma.vmem_to_hbm [thread:$0]  %s1413, 16, %s1410, %s1400
        $region122: #{tpu_custom_call.1} parent=113 // pred_fallthru
          _
      $region114: #{tpu_custom_call.1} parent=5 // pred_fallthru
        _
      %p1416 = scmp.le.s32.totalorder 2, %s26
      // Predicated region
      $region123: #{tpu_custom_call.1} parent=5 // pred_check
        %p1417 = pneg %p1416
      $region124: #{tpu_custom_call.1} parent=5 // pred_check_branch
        %1419 = sbr.rel (%p1417) target = $region126
      $region125: #{tpu_custom_call.1} parent=5 // pred_region
        %s1420 = ssub.s32 %s26, 2
        // Predicated region
        $region127: #{tpu_custom_call.1} parent=125 // pred_check
          %p1421 = pneg %p375
        $region128: #{tpu_custom_call.1} parent=125 // pred_check_branch
          %1423 = sbr.rel (%p1421) target = $region130
        $region129: #{tpu_custom_call.1} parent=125 // pred_region
          %s1424 = sand.u32 %s360, 1
          %s1425 = scalar_lea.sflag [#allocation5], %s1424
          %s1426 = sand.u32 %s360, 1
          %s1427 = scalar_lea.vmem [#allocation4], %s1426
          %1428 = dma.done %s1425, 16
        $region130: #{tpu_custom_call.1} parent=125 // pred_fallthru
          _
      $region126: #{tpu_custom_call.1} parent=5 // pred_fallthru
        _
    $region6: #{tpu_custom_call.1} parent=1 // loop_footer
      %s30 = sadd.s32 1, %s26
    $region7: #{tpu_custom_call.1} parent=1 // loop_footer_branch
      %25 = sbr.rel target = $region3
    $region8: #{tpu_custom_call.1} parent=1 // loop_exit
      _
    %1429 = vsyncpa [#allocation5], 1
    %s1430 = scalar_lea.sflag [#allocation5], 1
    %1431 = vsyncpa %s1430, 1

</llo_original>
